<compile_context>
chip_gen: v7x
topology: tpu7x:2x2x1
jax: 0.10.0
libtpu: 0.0.40
codegen_flags: <defaults>
</compile_context>

<pallas_src>
import jax
import jax.numpy as jnp
from jax import lax
from jax.experimental import pallas as pl
from jax.experimental.pallas import tpu as pltpu


def _decoder_kernel(enc_ref, dec_ref, scale_ref, shift_ref, w_ref, b_ref,
                    out_ref, xpad):
    # enc_ref:  (1, H, W, Cin)  f32   raw encoder features
    # dec_ref:  (1, H, W, Cin)  bf16  decoder features (already upsampled)
    # scale_ref/shift_ref: (1, 1, Cin) f32 fused BatchNorm affine (inference)
    # w_ref:    (9*2*Cin, Cout_pad) bf16 conv weights, K ordered (ky, kx, c)
    # b_ref:    (1, Cout_pad) f32
    # out_ref:  (1, H*W, Cout_pad) f32 lane-dense output slab
    # xpad:     (H+2, W+2, 2*Cin) f32 scratch (persistent across grid steps)
    H = enc_ref.shape[1]
    W = enc_ref.shape[2]
    Cin = enc_ref.shape[3]
    C2 = 2 * Cin

    # Zero only the 1-pixel border; the interior is fully overwritten below.
    # (Per-step, so it is correct even when the batch axis is megacore-sharded.)
    xpad[0:1, :, :] = jnp.zeros((1, W + 2, C2), xpad.dtype)
    xpad[H + 1:H + 2, :, :] = jnp.zeros((1, W + 2, C2), xpad.dtype)
    xpad[:, 0:1, :] = jnp.zeros((H + 2, 1, C2), xpad.dtype)
    xpad[:, W + 1:W + 2, :] = jnp.zeros((H + 2, 1, C2), xpad.dtype)

    # BatchNorm (inference affine) + ReLU in f32, concat with the upsampled
    # decoder features along channels, one store into the scratch interior.
    # Zero padding is applied AFTER BN+ReLU, matching PyTorch conv semantics.
    enc = jnp.maximum(enc_ref[0] * scale_ref[...] + shift_ref[...], 0.0)
    cat = jnp.concatenate([enc, dec_ref[0].astype(jnp.float32)], axis=-1)
    xpad[1:H + 1, 1:W + 1, :] = cat

    # im2col: 9 shifted windows concatenated along K -> one MXU matmul with
    # bf16 operands and f32 accumulation.
    cols = [xpad[ky:ky + H, kx:kx + W, :].reshape(H * W, C2)
            for ky in range(3) for kx in range(3)]
    patches = jnp.concatenate(cols, axis=-1).astype(w_ref.dtype)  # (H*W, 9*C2)
    acc = jnp.dot(patches, w_ref[...],
                  preferred_element_type=jnp.float32)             # (H*W, Cout_pad)
    out_ref[0] = (acc + b_ref[...]).astype(out_ref.dtype)


def decoder_module_part1_pallas(enc_nhwc, dec_up_bf16, bn_scale, bn_shift,
                                w_k, b_pad):
    """enc_nhwc: (N,H,W,Cin) f32; dec_up_bf16: (N,H,W,Cin) bf16 (upsampled);
       bn_scale/bn_shift: (1,1,Cin) f32; w_k: (9*2*Cin, Cout_pad) bf16;
       b_pad: (1, Cout_pad) f32.  Returns (N, H, W, Cout_pad) f32."""
    N, H, W, Cin = enc_nhwc.shape
    Cout_pad = w_k.shape[-1]

    grid_spec = pltpu.PrefetchScalarGridSpec(
        num_scalar_prefetch=0,
        grid=(N,),
        in_specs=[
            pl.BlockSpec((1, H, W, Cin), lambda n: (n, 0, 0, 0)),
            pl.BlockSpec((1, H, W, Cin), lambda n: (n, 0, 0, 0)),
            pl.BlockSpec((1, 1, Cin), lambda n: (0, 0, 0)),
            pl.BlockSpec((1, 1, Cin), lambda n: (0, 0, 0)),
            pl.BlockSpec(w_k.shape, lambda n: (0, 0)),
            pl.BlockSpec((1, Cout_pad), lambda n: (0, 0)),
        ],
        out_specs=pl.BlockSpec((1, H * W, Cout_pad), lambda n: (n, 0, 0)),
        scratch_shapes=[pltpu.VMEM((H + 2, W + 2, 2 * Cin), jnp.float32)],
    )

    out = pl.pallas_call(
        _decoder_kernel,
        out_shape=jax.ShapeDtypeStruct((N, H * W, Cout_pad), jnp.float32),
        grid_spec=grid_spec,
        compiler_params=pltpu.CompilerParams(
            dimension_semantics=("parallel",)),
    )(enc_nhwc, dec_up_bf16, bn_scale, bn_shift, w_k, b_pad)
    return out.reshape(N, H, W, Cout_pad)


def bilinear_upsample_align_corners(x, out_h, out_w):
    """x: (N, H, W, C) -> (N, out_h, out_w, C); matches F.upsample(...,
    mode='bilinear', align_corners=True)."""
    N, H, W, C = x.shape
    if H == out_h and W == out_w:
        return x
    ys = jnp.linspace(0.0, H - 1.0, out_h) if out_h > 1 else jnp.zeros((1,))
    xs = jnp.linspace(0.0, W - 1.0, out_w) if out_w > 1 else jnp.zeros((1,))
    y0 = jnp.floor(ys).astype(jnp.int32)
    x0 = jnp.floor(xs).astype(jnp.int32)
    y1 = jnp.minimum(y0 + 1, H - 1)
    x1 = jnp.minimum(x0 + 1, W - 1)
    wy = (ys - y0.astype(ys.dtype))[None, :, None, None]
    wx = (xs - x0.astype(xs.dtype))[None, None, :, None]
    a = x[:, y0][:, :, x0]
    b = x[:, y0][:, :, x1]
    c = x[:, y1][:, :, x0]
    d = x[:, y1][:, :, x1]
    top = a * (1.0 - wx) + b * wx
    bot = c * (1.0 - wx) + d * wx
    return top * (1.0 - wy) + bot * wy


def decoder_module_part1_forward(enc_nhwc, dec_nhwc, bn_scale, bn_shift,
                                 w_torch, conv_bias):
    """Forward of decoder_module_part1 (fusing=True, inference-mode BN), NHWC.
    w_torch: (Cout, 2*Cin, 3, 3) PyTorch conv weight; conv_bias: (Cout,).
    Returns (N, H, W, Cout) f32."""
    N, H, W, Cin = enc_nhwc.shape
    Cout = w_torch.shape[0]

    # TODO(synk): fuse the align_corners bilinear upsample into the kernel to
    # avoid the HBM round-trip of dec_up (largest input stream; biggest relative
    # win on v5e/v6e).  For now it runs as XLA glue but is shipped in bf16.
    dec_up = bilinear_upsample_align_corners(dec_nhwc, H, W).astype(jnp.bfloat16)

    # Conv weights -> dense K-major (ky, kx, channel) operand, Cout zero-padded
    # to a lane multiple so kernel stores are dense.
    LANE = 128
    Cout_pad = ((Cout + LANE - 1) // LANE) * LANE
    w_k = jnp.transpose(w_torch, (2, 3, 1, 0)).reshape(9 * 2 * Cin, Cout)
    w_k = jnp.pad(w_k, ((0, 0), (0, Cout_pad - Cout))).astype(jnp.bfloat16)
    b_pad = jnp.pad(conv_bias, (0, Cout_pad - Cout)).reshape(1, Cout_pad)

    out = decoder_module_part1_pallas(enc_nhwc, dec_up, bn_scale, bn_shift,
                                      w_k, b_pad)
    return out[..., :Cout]


if __name__ == "__main__":
    # Small shapes consistent with the module (fusing=True path).
    N, Cin, H, W = 2, 4, 16, 16
    Cout = 8
    Hd, Wd = 8, 8  # decoder feature arrives at lower resolution

    key = jax.random.PRNGKey(0)
    k = jax.random.split(key, 8)

    # PyTorch would be NCHW; build NCHW then convert to NHWC for the kernel.
    enc_nchw = jax.random.normal(k[0], (N, Cin, H, W), jnp.float32)
    dec_nchw = jax.random.normal(k[1], (N, Cin, Hd, Wd), jnp.float32)
    enc_nhwc = jnp.transpose(enc_nchw, (0, 2, 3, 1))
    dec_nhwc = jnp.transpose(dec_nchw, (0, 2, 3, 1))

    # BatchNorm2d(in_channels) inference-mode affine (momentum irrelevant here).
    gamma = 1.0 + 0.1 * jax.random.normal(k[2], (Cin,), jnp.float32)
    beta = 0.1 * jax.random.normal(k[3], (Cin,), jnp.float32)
    running_mean = 0.1 * jax.random.normal(k[4], (Cin,), jnp.float32)
    running_var = jnp.abs(jax.random.normal(k[5], (Cin,), jnp.float32)) + 0.5
    eps = 1e-5
    scale_v = gamma / jnp.sqrt(running_var + eps)
    bn_scale = scale_v.reshape(1, 1, Cin)
    bn_shift = (beta - running_mean * scale_v).reshape(1, 1, Cin)

    # Conv2d(2*Cin, Cout, 3, padding=1) weights in PyTorch layout.
    w_torch = 0.1 * jax.random.normal(k[6], (Cout, 2 * Cin, 3, 3), jnp.float32)
    conv_bias = 0.1 * jax.random.normal(k[7], (Cout,), jnp.float32)

    out = decoder_module_part1_forward(enc_nhwc, dec_nhwc, bn_scale, bn_shift,
                                       w_torch, conv_bias)
    out = jax.block_until_ready(out)

    # Reference in plain JAX with matching bf16 operand rounding + f32 accum.
    enc_proc = jnp.maximum(enc_nhwc * bn_scale + bn_shift, 0.0)
    dec_up_ref = bilinear_upsample_align_corners(dec_nhwc, H, W).astype(
        jnp.bfloat16).astype(jnp.float32)
    x_cat = jnp.concatenate([enc_proc, dec_up_ref], axis=-1).astype(jnp.bfloat16)
    w_hwio = jnp.transpose(w_torch, (2, 3, 1, 0)).astype(jnp.bfloat16)
    ref = lax.conv_general_dilated(
        x_cat, w_hwio, window_strides=(1, 1), padding="SAME",
        dimension_numbers=("NHWC", "HWIO", "NHWC"),
        preferred_element_type=jnp.float32) + conv_bias

    err = float(jnp.max(jnp.abs(out - ref)))
    assert err < 5e-3, err

    print("KERNEL_OK")
</pallas_src>

<mosaic_0001>
module attributes {stable_mosaic.version = 11 : i64} {
  func.func @_decoder_kernel(%arg0: i32, %arg1: memref<1x16x16x4xf32, #tpu.memory_space<vmem>>, %arg2: memref<1x16x16x4xbf16, #tpu.memory_space<vmem>>, %arg3: memref<1x1x4xf32, #tpu.memory_space<vmem>>, %arg4: memref<1x1x4xf32, #tpu.memory_space<vmem>>, %arg5: memref<72x128xbf16, #tpu.memory_space<vmem>>, %arg6: memref<1x128xf32, #tpu.memory_space<vmem>>, %arg7: memref<1x256x128xf32, #tpu.memory_space<vmem>>, %arg8: memref<18x18x8xf32, #tpu.memory_space<vmem>>) attributes {dimension_semantics = [#tpu.dimension_semantics<parallel>], iteration_bounds = array<i64: 2>, scalar_prefetch = 0 : i64, scratch_operands = 1 : i64, tpu.core_type = #tpu.core_type<tc>, window_params = [{transform_indices = @transform_0, window_bounds = array<i64: 1, 16, 16, 4>}, {transform_indices = @transform_1, window_bounds = array<i64: 1, 16, 16, 4>}, {pipeline_mode = #tpu.pipeline_mode<synchronous>, transform_indices = @transform_2, window_bounds = array<i64: 1, 1, 4>}, {pipeline_mode = #tpu.pipeline_mode<synchronous>, transform_indices = @transform_3, window_bounds = array<i64: 1, 1, 4>}, {pipeline_mode = #tpu.pipeline_mode<synchronous>, transform_indices = @transform_4, window_bounds = array<i64: 72, 128>}, {pipeline_mode = #tpu.pipeline_mode<synchronous>, transform_indices = @transform_5, window_bounds = array<i64: 1, 128>}, {transform_indices = @transform_6, window_bounds = array<i64: 1, 256, 128>}]} {
    %cst = arith.constant 0.000000e+00 : f32
    %0 = vector.broadcast %cst : f32 to vector<1x18x8xf32>
    %c0 = arith.constant 0 : index
    %c0_0 = arith.constant 0 : index
    %c0_1 = arith.constant 0 : index
    %1 = vector.load %arg8[%c0, %c0_0, %c0_1] : memref<18x18x8xf32, #tpu.memory_space<vmem>>, vector<1x18x8xf32>
    tpu.vector_store %arg8[%c0, %c0_0, %c0_1], %0 {strides = array<i32>} : memref<18x18x8xf32, #tpu.memory_space<vmem>>, vector<1x18x8xf32>,
    %cst_2 = arith.constant 0.000000e+00 : f32
    %2 = vector.broadcast %cst_2 : f32 to vector<1x18x8xf32>
    %c17 = arith.constant 17 : index
    %c0_3 = arith.constant 0 : index
    %c0_4 = arith.constant 0 : index
    %3 = vector.load %arg8[%c17, %c0_3, %c0_4] : memref<18x18x8xf32, #tpu.memory_space<vmem>>, vector<1x18x8xf32>
    tpu.vector_store %arg8[%c17, %c0_3, %c0_4], %2 {strides = array<i32>} : memref<18x18x8xf32, #tpu.memory_space<vmem>>, vector<1x18x8xf32>,
    %cst_5 = arith.constant 0.000000e+00 : f32
    %4 = vector.broadcast %cst_5 : f32 to vector<18x1x8xf32>
    %c0_6 = arith.constant 0 : index
    %c0_7 = arith.constant 0 : index
    %c0_8 = arith.constant 0 : index
    %5 = vector.load %arg8[%c0_6, %c0_7, %c0_8] : memref<18x18x8xf32, #tpu.memory_space<vmem>>, vector<18x1x8xf32>
    tpu.vector_store %arg8[%c0_6, %c0_7, %c0_8], %4 {strides = array<i32>} : memref<18x18x8xf32, #tpu.memory_space<vmem>>, vector<18x1x8xf32>,
    %cst_9 = arith.constant 0.000000e+00 : f32
    %6 = vector.broadcast %cst_9 : f32 to vector<18x1x8xf32>
    %c0_10 = arith.constant 0 : index
    %c17_11 = arith.constant 17 : index
    %c0_12 = arith.constant 0 : index
    %7 = vector.load %arg8[%c0_10, %c17_11, %c0_12] : memref<18x18x8xf32, #tpu.memory_space<vmem>>, vector<18x1x8xf32>
    tpu.vector_store %arg8[%c0_10, %c17_11, %c0_12], %6 {strides = array<i32>} : memref<18x18x8xf32, #tpu.memory_space<vmem>>, vector<18x1x8xf32>,
    %c0_13 = arith.constant 0 : index
    %c0_14 = arith.constant 0 : index
    %c0_15 = arith.constant 0 : index
    %c0_16 = arith.constant 0 : index
    %8 = vector.load %arg1[%c0_13, %c0_14, %c0_15, %c0_16] : memref<1x16x16x4xf32, #tpu.memory_space<vmem>>, vector<1x16x16x4xf32>
    %9 = vector.shape_cast %8 : vector<1x16x16x4xf32> to vector<16x16x4xf32>
    %c0_17 = arith.constant 0 : index
    %c0_18 = arith.constant 0 : index
    %c0_19 = arith.constant 0 : index
    %10 = vector.load %arg3[%c0_17, %c0_18, %c0_19] : memref<1x1x4xf32, #tpu.memory_space<vmem>>, vector<1x1x4xf32>
    %11 = vector.broadcast %10 : vector<1x1x4xf32> to vector<16x16x4xf32>
    %12 = arith.mulf %9, %11 : vector<16x16x4xf32>
    %c0_20 = arith.constant 0 : index
    %c0_21 = arith.constant 0 : index
    %c0_22 = arith.constant 0 : index
    %13 = vector.load %arg4[%c0_20, %c0_21, %c0_22] : memref<1x1x4xf32, #tpu.memory_space<vmem>>, vector<1x1x4xf32>
    %14 = vector.broadcast %13 : vector<1x1x4xf32> to vector<16x16x4xf32>
    %15 = arith.addf %12, %14 : vector<16x16x4xf32>
    %cst_23 = arith.constant 0.000000e+00 : f32
    %16 = vector.broadcast %cst_23 : f32 to vector<16x16x4xf32>
    %17 = arith.maximumf %15, %16 : vector<16x16x4xf32>
    %c0_24 = arith.constant 0 : index
    %c0_25 = arith.constant 0 : index
    %c0_26 = arith.constant 0 : index
    %c0_27 = arith.constant 0 : index
    %18 = vector.load %arg2[%c0_24, %c0_25, %c0_26, %c0_27] : memref<1x16x16x4xbf16, #tpu.memory_space<vmem>>, vector<1x16x16x4xbf16>
    %19 = vector.shape_cast %18 : vector<1x16x16x4xbf16> to vector<16x16x4xbf16>
    %20 = arith.extf %19 : vector<16x16x4xbf16> to vector<16x16x4xf32>
    %21 = tpu.concatenate %17, %20 in 2 : vector<16x16x4xf32>, vector<16x16x4xf32> -> vector<16x16x8xf32>
    %c1 = arith.constant 1 : index
    %c1_28 = arith.constant 1 : index
    %c0_29 = arith.constant 0 : index
    %22 = vector.load %arg8[%c1, %c1_28, %c0_29] : memref<18x18x8xf32, #tpu.memory_space<vmem>>, vector<16x16x8xf32>
    tpu.vector_store %arg8[%c1, %c1_28, %c0_29], %21 {strides = array<i32>} : memref<18x18x8xf32, #tpu.memory_space<vmem>>, vector<16x16x8xf32>,
    %c0_30 = arith.constant 0 : index
    %c0_31 = arith.constant 0 : index
    %c0_32 = arith.constant 0 : index
    %23 = vector.load %arg8[%c0_30, %c0_31, %c0_32] : memref<18x18x8xf32, #tpu.memory_space<vmem>>, vector<16x16x8xf32>
    %24 = vector.shape_cast %23 : vector<16x16x8xf32> to vector<256x8xf32>
    %c0_33 = arith.constant 0 : index
    %c1_34 = arith.constant 1 : index
    %c0_35 = arith.constant 0 : index
    %25 = vector.load %arg8[%c0_33, %c1_34, %c0_35] : memref<18x18x8xf32, #tpu.memory_space<vmem>>, vector<16x16x8xf32>
    %26 = vector.shape_cast %25 : vector<16x16x8xf32> to vector<256x8xf32>
    %c0_36 = arith.constant 0 : index
    %c2 = arith.constant 2 : index
    %c0_37 = arith.constant 0 : index
    %27 = vector.load %arg8[%c0_36, %c2, %c0_37] : memref<18x18x8xf32, #tpu.memory_space<vmem>>, vector<16x16x8xf32>
    %28 = vector.shape_cast %27 : vector<16x16x8xf32> to vector<256x8xf32>
    %c1_38 = arith.constant 1 : index
    %c0_39 = arith.constant 0 : index
    %c0_40 = arith.constant 0 : index
    %29 = vector.load %arg8[%c1_38, %c0_39, %c0_40] : memref<18x18x8xf32, #tpu.memory_space<vmem>>, vector<16x16x8xf32>
    %30 = vector.shape_cast %29 : vector<16x16x8xf32> to vector<256x8xf32>
    %c1_41 = arith.constant 1 : index
    %c1_42 = arith.constant 1 : index
    %c0_43 = arith.constant 0 : index
    %31 = vector.load %arg8[%c1_41, %c1_42, %c0_43] : memref<18x18x8xf32, #tpu.memory_space<vmem>>, vector<16x16x8xf32>
    %32 = vector.shape_cast %31 : vector<16x16x8xf32> to vector<256x8xf32>
    %c1_44 = arith.constant 1 : index
    %c2_45 = arith.constant 2 : index
    %c0_46 = arith.constant 0 : index
    %33 = vector.load %arg8[%c1_44, %c2_45, %c0_46] : memref<18x18x8xf32, #tpu.memory_space<vmem>>, vector<16x16x8xf32>
    %34 = vector.shape_cast %33 : vector<16x16x8xf32> to vector<256x8xf32>
    %c2_47 = arith.constant 2 : index
    %c0_48 = arith.constant 0 : index
    %c0_49 = arith.constant 0 : index
    %35 = vector.load %arg8[%c2_47, %c0_48, %c0_49] : memref<18x18x8xf32, #tpu.memory_space<vmem>>, vector<16x16x8xf32>
    %36 = vector.shape_cast %35 : vector<16x16x8xf32> to vector<256x8xf32>
    %c2_50 = arith.constant 2 : index
    %c1_51 = arith.constant 1 : index
    %c0_52 = arith.constant 0 : index
    %37 = vector.load %arg8[%c2_50, %c1_51, %c0_52] : memref<18x18x8xf32, #tpu.memory_space<vmem>>, vector<16x16x8xf32>
    %38 = vector.shape_cast %37 : vector<16x16x8xf32> to vector<256x8xf32>
    %c2_53 = arith.constant 2 : index
    %c2_54 = arith.constant 2 : index
    %c0_55 = arith.constant 0 : index
    %39 = vector.load %arg8[%c2_53, %c2_54, %c0_55] : memref<18x18x8xf32, #tpu.memory_space<vmem>>, vector<16x16x8xf32>
    %40 = vector.shape_cast %39 : vector<16x16x8xf32> to vector<256x8xf32>
    %41 = tpu.concatenate %24, %26, %28, %30, %32, %34, %36, %38, %40 in 1 : vector<256x8xf32>, vector<256x8xf32>, vector<256x8xf32>, vector<256x8xf32>, vector<256x8xf32>, vector<256x8xf32>, vector<256x8xf32>, vector<256x8xf32>, vector<256x8xf32> -> vector<256x72xf32>
    %42 = arith.truncf %41 : vector<256x72xf32> to vector<256x72xbf16>
    %c0_56 = arith.constant 0 : index
    %c0_57 = arith.constant 0 : index
    %43 = vector.load %arg5[%c0_56, %c0_57] : memref<72x128xbf16, #tpu.memory_space<vmem>>, vector<72x128xbf16>
    %cst_58 = arith.constant dense<0.000000e+00> : vector<256x128xf32>
    %44 = tpu.matmul %42, %43, %cst_58 {dimension_numbers = #tpu.dot_dimension_numbers<[1], [0], [0], [1], [0, 0, 1, 1], [], []>} : vector<256x72xbf16>, vector<72x128xbf16>, vector<256x128xf32> -> vector<256x128xf32>
    %c0_59 = arith.constant 0 : index
    %c0_60 = arith.constant 0 : index
    %45 = vector.load %arg6[%c0_59, %c0_60] : memref<1x128xf32, #tpu.memory_space<vmem>>, vector<1x128xf32>
    %46 = vector.broadcast %45 : vector<1x128xf32> to vector<256x128xf32>
    %47 = arith.addf %44, %46 : vector<256x128xf32>
    %c0_61 = arith.constant 0 : index
    %c0_62 = arith.constant 0 : index
    %c0_63 = arith.constant 0 : index
    %48 = vector.load %arg7[%c0_61, %c0_62, %c0_63] : memref<1x256x128xf32, #tpu.memory_space<vmem>>, vector<1x256x128xf32>
    %49 = vector.shape_cast %48 : vector<1x256x128xf32> to vector<256x128xf32>
    %50 = vector.shape_cast %47 : vector<256x128xf32> to vector<1x256x128xf32>
    tpu.vector_store %arg7[%c0_61, %c0_62, %c0_63], %50 {strides = array<i32>} : memref<1x256x128xf32, #tpu.memory_space<vmem>>, vector<1x256x128xf32>,
    return
  }
  func.func @transform_0(%arg0: i32) -> (i32, i32, i32, i32) {
    %c0_i32 = arith.constant 0 : i32
    %c0_i32_0 = arith.constant 0 : i32
    %c0_i32_1 = arith.constant 0 : i32
    %c0_i32_2 = arith.constant 0 : i32
    return %arg0, %c0_i32, %c0_i32_0, %c0_i32_1 : i32, i32, i32, i32
  }
  func.func @transform_1(%arg0: i32) -> (i32, i32, i32, i32) {
    %c0_i32 = arith.constant 0 : i32
    %c0_i32_0 = arith.constant 0 : i32
    %c0_i32_1 = arith.constant 0 : i32
    %c0_i32_2 = arith.constant 0 : i32
    return %arg0, %c0_i32, %c0_i32_0, %c0_i32_1 : i32, i32, i32, i32
  }
  func.func @transform_2(%arg0: i32) -> (i32, i32, i32) {
    %c0_i32 = arith.constant 0 : i32
    %c0_i32_0 = arith.constant 0 : i32
    %c0_i32_1 = arith.constant 0 : i32
    %c0_i32_2 = arith.constant 0 : i32
    return %c0_i32, %c0_i32_0, %c0_i32_1 : i32, i32, i32
  }
  func.func @transform_3(%arg0: i32) -> (i32, i32, i32) {
    %c0_i32 = arith.constant 0 : i32
    %c0_i32_0 = arith.constant 0 : i32
    %c0_i32_1 = arith.constant 0 : i32
    %c0_i32_2 = arith.constant 0 : i32
    return %c0_i32, %c0_i32_0, %c0_i32_1 : i32, i32, i32
  }
  func.func @transform_4(%arg0: i32) -> (i32, i32) {
    %c0_i32 = arith.constant 0 : i32
    %c0_i32_0 = arith.constant 0 : i32
    %c0_i32_1 = arith.constant 0 : i32
    return %c0_i32, %c0_i32_0 : i32, i32
  }
  func.func @transform_5(%arg0: i32) -> (i32, i32) {
    %c0_i32 = arith.constant 0 : i32
    %c0_i32_0 = arith.constant 0 : i32
    %c0_i32_1 = arith.constant 0 : i32
    return %c0_i32, %c0_i32_0 : i32, i32
  }
  func.func @transform_6(%arg0: i32) -> (i32, i32, i32) {
    %c0_i32 = arith.constant 0 : i32
    %c0_i32_0 = arith.constant 0 : i32
    %c0_i32_1 = arith.constant 0 : i32
    return %arg0, %c0_i32, %c0_i32_0 : i32, i32, i32
  }
}

</mosaic_0001>

<llo_original>
// kernel: tpu_custom_call.1
$region0: #{tpu_custom_call.1}
  #allocation0 [shape = 'u32[]', space=smem, size = 0x4, offset = 0x4, fixed_abs, tag = 'smem constant byte address 0x4 - core index']
  #allocation1 [shape = 'u32[144,128]{1,0:T(1,128)}', space=vmem, size = 0x12000, scoped, tag = 'internal scratch']
  #allocation2 [shape = 'f32[18,18,8]{2,1,0:T(8,128)}', space=vmem, size = 0x36000, scoped, tag = 'scratch operand']
  %s0 = inlined_call_operand.vmem [shape: f32[2,16,16,4], index: 0, kind: input, shape index: {}]
  %s1 = inlined_call_operand.vmem [shape: bf16[2,16,16,4], index: 1, kind: input, shape index: {}]
  %s2 = inlined_call_operand.vmem [shape: f32[1,1,4], index: 2, kind: input, shape index: {}]
  %s3 = inlined_call_operand.vmem [shape: f32[1,1,4], index: 3, kind: input, shape index: {}]
  %s4 = inlined_call_operand.vmem [shape: bf16[72,128], index: 4, kind: input, shape index: {}]
  %s5 = inlined_call_operand.vmem [shape: f32[1,128], index: 5, kind: input, shape index: {}]
  %s6 = inlined_call_operand.hbm [shape: f32[2,256,128], index: 6, kind: output, shape index: {}]
  %s7 = sld [smem:[#allocation0]]
  $region57: #{tpu_custom_call.1} parent=0
    _
  %s9 = ssub.s32 1, %s7
  %s10 = scalar_select 0, %s9, %s7
  $region1: #{tpu_custom_call.1} parent=0
    #allocation3 [shape = 'u8[262144]{0}', space=vmem, size = 0x40000, scoped, tag = 'output window, operand 0']
    #allocation4 [shape = 's32[2]{0}', space=sflag, size = 0x8, scoped, tag = 'scoped memory for tpu_custom_call.1']
    %11 = vsyncpa [#allocation4], 0
    %s12 = scalar_lea.sflag [#allocation4], 1
    %13 = vsyncpa %s12, 0
    loop: start=0, step=1, limit=4
    $region2: #{tpu_custom_call.1} parent=1 // loop_pre_header
      _
    $region3: #{tpu_custom_call.1} parent=1 // loop_header
      %s15 = sphi 0, %s19
      %p16 = scmp.ge.s32.totalorder %s15, 4
      %s25 = sphi 0, %s27
      %s28 = sphi 0, %s25
      %s29 = sphi 0, %s28
      %s45 = sphi 0, %s29
      %s51 = sphi 0, %s53
      %s54 = sphi 0, %s51
      %s55 = sphi 0, %s54
      %s71 = sphi 0, %s55
      %s75 = sphi 0, %s75
      %s77 = sphi 0, %s75
      %s78 = sphi 0, %s77
      %s92 = sphi 0, %s78
      %s96 = sphi 0, %s96
      %s98 = sphi 0, %s96
      %s99 = sphi 0, %s98
      %s113 = sphi 0, %s99
      %s117 = sphi 0, %s117
      %s119 = sphi 0, %s117
      %s120 = sphi 0, %s119
      %s134 = sphi 0, %s120
      %s138 = sphi 0, %s138
      %s140 = sphi 0, %s138
      %s141 = sphi 0, %s140
      %s155 = sphi 0, %s141
      %s161 = sphi 0, %s163
      %s164 = sphi 0, %s161
      %s165 = sphi 0, %s164
      %s181 = sphi 0, %s165
    $region4: #{tpu_custom_call.1} parent=1 // loop_header_branch
      %18 = sbr.rel (%p16) target = $region8
    $region5: #{tpu_custom_call.1} parent=1 // loop_body
      %s20 = ssub.s32 %s15, 1
      %s21 = ssub.s32 %s15, 2
      %s22 = sadd.s32 %s15, 1
      %s23 = ssub.s32 %s15, %s22
      %p24 = scmp.eq.s32.totalorder %s23, 0
      %s26 = sadd.s32 %s25, 1
      %s27 = scalar_select %p24, %s25, %s26
      %p30 = pneg %p24
      %p31 = scmp.eq.s32.totalorder %s15, 1
      %p32 = por %p30, %p31
      %p33 = scmp.ne.s32.totalorder %s25, %s28
      %p34 = scmp.eq.s32.totalorder %s15, 0
      %p35 = por %p33, %p34
      %p36 = scmp.ne.s32.totalorder %s25, %s28
      %p37 = scmp.eq.s32.totalorder %s20, 1
      %p38 = por %p36, %p37
      %p39 = scmp.ne.s32.totalorder %s28, %s29
      %p40 = scmp.eq.s32.totalorder %s20, 0
      %p41 = por %p39, %p40
      %p42 = scmp.ne.s32.totalorder %s28, %s29
      %p43 = scmp.eq.s32.totalorder %s21, 1
      %p44 = por %p42, %p43
      %p46 = scmp.ne.s32.totalorder %s29, %s45
      %p47 = scmp.eq.s32.totalorder %s21, 0
      %p48 = por %p46, %p47
      %s49 = ssub.s32 %s15, %s22
      %p50 = scmp.eq.s32.totalorder %s49, 0
      %s52 = sadd.s32 %s51, 1
      %s53 = scalar_select %p50, %s51, %s52
      %p56 = pneg %p50
      %p57 = scmp.eq.s32.totalorder %s15, 1
      %p58 = por %p56, %p57
      %p59 = scmp.ne.s32.totalorder %s51, %s54
      %p60 = scmp.eq.s32.totalorder %s15, 0
      %p61 = por %p59, %p60
      %p62 = scmp.ne.s32.totalorder %s51, %s54
      %p63 = scmp.eq.s32.totalorder %s20, 1
      %p64 = por %p62, %p63
      %p65 = scmp.ne.s32.totalorder %s54, %s55
      %p66 = scmp.eq.s32.totalorder %s20, 0
      %p67 = por %p65, %p66
      %p68 = scmp.ne.s32.totalorder %s54, %s55
      %p69 = scmp.eq.s32.totalorder %s21, 1
      %p70 = por %p68, %p69
      %p72 = scmp.ne.s32.totalorder %s55, %s71
      %p73 = scmp.eq.s32.totalorder %s21, 0
      %p74 = por %p72, %p73
      %s76 = sadd.s32 %s75, 1
      %p79 = scmp.eq.s32.totalorder %s15, 1
      %p80 = scmp.ne.s32.totalorder %s75, %s77
      %p81 = scmp.eq.s32.totalorder %s15, 0
      %p82 = por %p80, %p81
      %p83 = scmp.ne.s32.totalorder %s75, %s77
      %p84 = scmp.eq.s32.totalorder %s20, 1
      %p85 = por %p83, %p84
      %p86 = scmp.ne.s32.totalorder %s77, %s78
      %p87 = scmp.eq.s32.totalorder %s20, 0
      %p88 = por %p86, %p87
      %p89 = scmp.ne.s32.totalorder %s77, %s78
      %p90 = scmp.eq.s32.totalorder %s21, 1
      %p91 = por %p89, %p90
      %p93 = scmp.ne.s32.totalorder %s78, %s92
      %p94 = scmp.eq.s32.totalorder %s21, 0
      %p95 = por %p93, %p94
      %s97 = sadd.s32 %s96, 1
      %p100 = scmp.eq.s32.totalorder %s15, 1
      %p101 = scmp.ne.s32.totalorder %s96, %s98
      %p102 = scmp.eq.s32.totalorder %s15, 0
      %p103 = por %p101, %p102
      %p104 = scmp.ne.s32.totalorder %s96, %s98
      %p105 = scmp.eq.s32.totalorder %s20, 1
      %p106 = por %p104, %p105
      %p107 = scmp.ne.s32.totalorder %s98, %s99
      %p108 = scmp.eq.s32.totalorder %s20, 0
      %p109 = por %p107, %p108
      %p110 = scmp.ne.s32.totalorder %s98, %s99
      %p111 = scmp.eq.s32.totalorder %s21, 1
      %p112 = por %p110, %p111
      %p114 = scmp.ne.s32.totalorder %s99, %s113
      %p115 = scmp.eq.s32.totalorder %s21, 0
      %p116 = por %p114, %p115
      %s118 = sadd.s32 %s117, 1
      %p121 = scmp.eq.s32.totalorder %s15, 1
      %p122 = scmp.ne.s32.totalorder %s117, %s119
      %p123 = scmp.eq.s32.totalorder %s15, 0
      %p124 = por %p122, %p123
      %p125 = scmp.ne.s32.totalorder %s117, %s119
      %p126 = scmp.eq.s32.totalorder %s20, 1
      %p127 = por %p125, %p126
      %p128 = scmp.ne.s32.totalorder %s119, %s120
      %p129 = scmp.eq.s32.totalorder %s20, 0
      %p130 = por %p128, %p129
      %p131 = scmp.ne.s32.totalorder %s119, %s120
      %p132 = scmp.eq.s32.totalorder %s21, 1
      %p133 = por %p131, %p132
      %p135 = scmp.ne.s32.totalorder %s120, %s134
      %p136 = scmp.eq.s32.totalorder %s21, 0
      %p137 = por %p135, %p136
      %s139 = sadd.s32 %s138, 1
      %p142 = scmp.eq.s32.totalorder %s15, 1
      %p143 = scmp.ne.s32.totalorder %s138, %s140
      %p144 = scmp.eq.s32.totalorder %s15, 0
      %p145 = por %p143, %p144
      %p146 = scmp.ne.s32.totalorder %s138, %s140
      %p147 = scmp.eq.s32.totalorder %s20, 1
      %p148 = por %p146, %p147
      %p149 = scmp.ne.s32.totalorder %s140, %s141
      %p150 = scmp.eq.s32.totalorder %s20, 0
      %p151 = por %p149, %p150
      %p152 = scmp.ne.s32.totalorder %s140, %s141
      %p153 = scmp.eq.s32.totalorder %s21, 1
      %p154 = por %p152, %p153
      %p156 = scmp.ne.s32.totalorder %s141, %s155
      %p157 = scmp.eq.s32.totalorder %s21, 0
      %p158 = por %p156, %p157
      %s159 = ssub.s32 %s15, %s22
      %p160 = scmp.eq.s32.totalorder %s159, 0
      %s162 = sadd.s32 %s161, 1
      %s163 = scalar_select %p160, %s161, %s162
      %p166 = pneg %p160
      %p167 = scmp.eq.s32.totalorder %s15, 1
      %p168 = por %p166, %p167
      %p169 = scmp.ne.s32.totalorder %s161, %s164
      %p170 = scmp.eq.s32.totalorder %s15, 0
      %p171 = por %p169, %p170
      %p172 = scmp.ne.s32.totalorder %s161, %s164
      %p173 = scmp.eq.s32.totalorder %s20, 1
      %p174 = por %p172, %p173
      %p175 = scmp.ne.s32.totalorder %s164, %s165
      %p176 = scmp.eq.s32.totalorder %s20, 0
      %p177 = por %p175, %p176
      %p178 = scmp.ne.s32.totalorder %s164, %s165
      %p179 = scmp.eq.s32.totalorder %s21, 1
      %p180 = por %p178, %p179
      %p182 = scmp.ne.s32.totalorder %s165, %s181
      %p183 = scmp.eq.s32.totalorder %s21, 0
      %p184 = por %p182, %p183
      %p185 = scmp.le.s32.totalorder 1, %s15
      %p186 = scmp.lt.s32.totalorder %s15, 3
      %p187 = pnand %p185, %p186
      %p188 = pneg %p187
      // Predicated region
      $region9: #{tpu_custom_call.1} parent=5 // pred_check
        _
      $region10: #{tpu_custom_call.1} parent=5 // pred_check_branch
        %190 = sbr.rel (%p187) target = $region12
      $region11: #{tpu_custom_call.1} parent=5 // pred_region
        %s191 = ssub.s32 %s15, 1
        // Predicated region
        $region13: #{tpu_custom_call.1} parent=11 // pred_check
          %p192 = pneg %p88
        $region14: #{tpu_custom_call.1} parent=11 // pred_check_branch
          %194 = sbr.rel (%p192) target = $region16
        $region15: #{tpu_custom_call.1} parent=11 // pred_region
          _
        $region16: #{tpu_custom_call.1} parent=11 // pred_fallthru
          _
        // Predicated region
        $region17: #{tpu_custom_call.1} parent=11 // pred_check
          %p195 = pneg %p109
        $region18: #{tpu_custom_call.1} parent=11 // pred_check_branch
          %197 = sbr.rel (%p195) target = $region20
        $region19: #{tpu_custom_call.1} parent=11 // pred_region
          _
        $region20: #{tpu_custom_call.1} parent=11 // pred_fallthru
          _
        // Predicated region
        $region21: #{tpu_custom_call.1} parent=11 // pred_check
          %p198 = pneg %p130
        $region22: #{tpu_custom_call.1} parent=11 // pred_check_branch
          %200 = sbr.rel (%p198) target = $region24
        $region23: #{tpu_custom_call.1} parent=11 // pred_region
          _
        $region24: #{tpu_custom_call.1} parent=11 // pred_fallthru
          _
        // Predicated region
        $region25: #{tpu_custom_call.1} parent=11 // pred_check
          %p201 = pneg %p151
        $region26: #{tpu_custom_call.1} parent=11 // pred_check_branch
          %203 = sbr.rel (%p201) target = $region28
        $region27: #{tpu_custom_call.1} parent=11 // pred_region
          _
        $region28: #{tpu_custom_call.1} parent=11 // pred_fallthru
          _
      $region12: #{tpu_custom_call.1} parent=5 // pred_fallthru
        _
      %p204 = scmp.lt.s32.totalorder %s15, 2
      // Predicated region
      $region29: #{tpu_custom_call.1} parent=5 // pred_check
        %p205 = pneg %p204
      $region30: #{tpu_custom_call.1} parent=5 // pred_check_branch
        %207 = sbr.rel (%p205) target = $region32
      $region31: #{tpu_custom_call.1} parent=5 // pred_region
        // Predicated region
        $region33: #{tpu_custom_call.1} parent=31 // pred_check
          %p208 = pneg %p35
        $region34: #{tpu_custom_call.1} parent=31 // pred_check_branch
          %210 = sbr.rel (%p208) target = $region36
        $region35: #{tpu_custom_call.1} parent=31 // pred_region
          %p211 = scmp.lt.s32.totalorder %s15, 1
          %s212 = scalar_select %p211, %s15, 1
          %s213 = smul.addr %s212, 32
          %s214 = smul.addr %s213, 8
          %s215 = scalar_lea.vmem %s0, %s214
        $region36: #{tpu_custom_call.1} parent=31 // pred_fallthru
          _
        // Predicated region
        $region37: #{tpu_custom_call.1} parent=31 // pred_check
          %p216 = pneg %p61
        $region38: #{tpu_custom_call.1} parent=31 // pred_check_branch
          %218 = sbr.rel (%p216) target = $region40
        $region39: #{tpu_custom_call.1} parent=31 // pred_region
          %p219 = scmp.lt.s32.totalorder %s15, 1
          %s220 = scalar_select %p219, %s15, 1
          %s221 = smul.addr %s220, 32
          %s222 = smul.addr %s221, 4
          %s223 = scalar_lea.vmem %s1, %s222
        $region40: #{tpu_custom_call.1} parent=31 // pred_fallthru
          _
      $region32: #{tpu_custom_call.1} parent=5 // pred_fallthru
        _
      %p224 = scmp.le.s32.totalorder 1, %s15
      %p225 = scmp.lt.s32.totalorder %s15, 3
      %p226 = pnand %p224, %p225
      %p227 = pneg %p226
      // Predicated region
      $region41: #{tpu_custom_call.1} parent=5 // pred_check
        _
      $region42: #{tpu_custom_call.1} parent=5 // pred_check_branch
        %229 = sbr.rel (%p226) target = $region44
      $region43: #{tpu_custom_call.1} parent=5 // pred_region
        %s230 = ssub.s32 %s15, 1
        %p231 = scmp.lt.s32.totalorder %s20, 1
        %s232 = scalar_select %p231, %s20, 1
        %s233 = smul.addr %s232, 32
        %s234 = smul.addr %s233, 8
        %s235 = scalar_lea.vmem %s0, %s234
        %p236 = pneg %p41
        %p237 = pneg %p38
        %p238 = scmp.lt.s32.totalorder %s20, 1
        %s239 = scalar_select %p238, %s20, 1
        %s240 = smul.addr %s239, 32
        %s241 = smul.addr %s240, 4
        %s242 = scalar_lea.vmem %s1, %s241
        %p243 = pneg %p67
        %p244 = pneg %p64
        %p245 = pneg %p88
        %p246 = pneg %p85
        %p247 = pneg %p109
        %p248 = pneg %p106
        %p249 = pneg %p130
        %p250 = pneg %p127
        %p251 = pneg %p151
        %p252 = pneg %p148
        %p253 = pneg %p177
        %p254 = pneg %p174
        %s255 = sand.u32 %s164, 1
        %s256 = scalar_lea.sflag [#allocation4], %s255
        %s257 = sand.u32 %s164, 1
        %s258 = smul.addr %s257, 256
        %s259 = scalar_lea.vmem [#allocation3], %s258
        %p260 = scmp.lt.s32.totalorder %s20, 1
        %s261 = scalar_select %p260, %s20, 1
        %s262 = smul.addr %s261, 32
        %s263 = smul.addr %s262, 8
        %s264 = scalar_lea.vmem %s0, %s263
        %p265 = scmp.lt.s32.totalorder %s20, 1
        %s266 = scalar_select %p265, %s20, 1
        %s267 = smul.addr %s266, 32
        %s268 = smul.addr %s267, 4
        %s269 = scalar_lea.vmem %s1, %s268
        %vm271 = vcmask 64512
        %272 = vst.msk [vmem:[#allocation2] sm:$0xff] %vm271, 0.0
        %273 = vst.msk [vmem:[#allocation2 + $0x8] sm:$0xff] %vm271, 0.0
        %vm274 = vcmask 58368
        %275 = vst.msk [vmem:[#allocation2 + $0x10] sm:$0x3] %vm274, 0.0
        %s276 = scalar_lea.vmem [#allocation2], 408
        %277 = vst.msk [vmem:[%s276] sm:$0xff] %vm271, 0.0
        %278 = vst.msk [vmem:[%s276 + $0x8] sm:$0xff] %vm271, 0.0
        %279 = vst.msk [vmem:[%s276 + $0x10] sm:$0x3] %vm274, 0.0
        %vm280 = vcmask 57344
        %281 = vst.msk [vmem:[#allocation2] sm:$0x1] %vm280, 0.0
        %282 = vst.msk [vmem:[#allocation2 + $0x18] sm:$0x1] %vm280, 0.0
        %283 = vst.msk [vmem:[#allocation2 + $0x30] sm:$0x1] %vm280, 0.0
        %284 = vst.msk [vmem:[#allocation2 + $0x48] sm:$0x1] %vm280, 0.0
        %285 = vst.msk [vmem:[#allocation2 + $0x60] sm:$0x1] %vm280, 0.0
        %286 = vst.msk [vmem:[#allocation2 + $0x78] sm:$0x1] %vm280, 0.0
        %287 = vst.msk [vmem:[#allocation2 + $0x90] sm:$0x1] %vm280, 0.0
        %288 = vst.msk [vmem:[#allocation2 + $0xa8] sm:$0x1] %vm280, 0.0
        %289 = vst.msk [vmem:[#allocation2 + $0xc0] sm:$0x1] %vm280, 0.0
        %290 = vst.msk [vmem:[#allocation2 + $0xd8] sm:$0x1] %vm280, 0.0
        %291 = vst.msk [vmem:[#allocation2 + $0xf0] sm:$0x1] %vm280, 0.0
        %292 = vst.msk [vmem:[#allocation2 + $0x108] sm:$0x1] %vm280, 0.0
        %293 = vst.msk [vmem:[#allocation2 + $0x120] sm:$0x1] %vm280, 0.0
        %294 = vst.msk [vmem:[#allocation2 + $0x138] sm:$0x1] %vm280, 0.0
        %295 = vst.msk [vmem:[#allocation2 + $0x150] sm:$0x1] %vm280, 0.0
        %296 = vst.msk [vmem:[#allocation2 + $0x168] sm:$0x1] %vm280, 0.0
        %297 = vst.msk [vmem:[#allocation2 + $0x180] sm:$0x1] %vm280, 0.0
        %298 = vst.msk [vmem:[#allocation2 + $0x198] sm:$0x1] %vm280, 0.0
        %299 = vst.msk [vmem:[#allocation2 + $0x11] sm:$0x1] %vm280, 0.0
        %300 = vst.msk [vmem:[#allocation2 + $0x29] sm:$0x1] %vm280, 0.0
        %301 = vst.msk [vmem:[#allocation2 + $0x41] sm:$0x1] %vm280, 0.0
        %302 = vst.msk [vmem:[#allocation2 + $0x59] sm:$0x1] %vm280, 0.0
        %303 = vst.msk [vmem:[#allocation2 + $0x71] sm:$0x1] %vm280, 0.0
        %304 = vst.msk [vmem:[#allocation2 + $0x89] sm:$0x1] %vm280, 0.0
        %305 = vst.msk [vmem:[#allocation2 + $0xa1] sm:$0x1] %vm280, 0.0
        %306 = vst.msk [vmem:[#allocation2 + $0xb9] sm:$0x1] %vm280, 0.0
        %307 = vst.msk [vmem:[#allocation2 + $0xd1] sm:$0x1] %vm280, 0.0
        %308 = vst.msk [vmem:[#allocation2 + $0xe9] sm:$0x1] %vm280, 0.0
        %309 = vst.msk [vmem:[#allocation2 + $0x101] sm:$0x1] %vm280, 0.0
        %310 = vst.msk [vmem:[#allocation2 + $0x119] sm:$0x1] %vm280, 0.0
        %311 = vst.msk [vmem:[#allocation2 + $0x131] sm:$0x1] %vm280, 0.0
        %312 = vst.msk [vmem:[#allocation2 + $0x149] sm:$0x1] %vm280, 0.0
        %313 = vst.msk [vmem:[#allocation2 + $0x161] sm:$0x1] %vm280, 0.0
        %314 = vst.msk [vmem:[#allocation2 + $0x179] sm:$0x1] %vm280, 0.0
        %315 = vst.msk [vmem:[#allocation2 + $0x191] sm:$0x1] %vm280, 0.0
        %316 = vst.msk [vmem:[#allocation2 + $0x1a9] sm:$0x1] %vm280, 0.0
        %v317 = vld [vmem:[%s264] sm:$0xff]
        %v318 = vld [vmem:[%s264 + $0x8] sm:$0xff]
        %v319 = vld [vmem:[%s264 + $0x10] sm:$0xff]
        %v320 = vld [vmem:[%s264 + $0x18] sm:$0xff]
        %v321 = vld [vmem:[%s264 + $0x20] sm:$0xff]
        %v322 = vld [vmem:[%s264 + $0x28] sm:$0xff]
        %v323 = vld [vmem:[%s264 + $0x30] sm:$0xff]
        %v324 = vld [vmem:[%s264 + $0x38] sm:$0xff]
        %v325 = vld [vmem:[%s264 + $0x40] sm:$0xff]
        %v326 = vld [vmem:[%s264 + $0x48] sm:$0xff]
        %v327 = vld [vmem:[%s264 + $0x50] sm:$0xff]
        %v328 = vld [vmem:[%s264 + $0x58] sm:$0xff]
        %v329 = vld [vmem:[%s264 + $0x60] sm:$0xff]
        %v330 = vld [vmem:[%s264 + $0x68] sm:$0xff]
        %v331 = vld [vmem:[%s264 + $0x70] sm:$0xff]
        %v332 = vld [vmem:[%s264 + $0x78] sm:$0xff]
        %v333 = vld [vmem:[%s264 + $0x80] sm:$0xff]
        %v334 = vld [vmem:[%s264 + $0x88] sm:$0xff]
        %v335 = vld [vmem:[%s264 + $0x90] sm:$0xff]
        %v336 = vld [vmem:[%s264 + $0x98] sm:$0xff]
        %v337 = vld [vmem:[%s264 + $0xa0] sm:$0xff]
        %v338 = vld [vmem:[%s264 + $0xa8] sm:$0xff]
        %v339 = vld [vmem:[%s264 + $0xb0] sm:$0xff]
        %v340 = vld [vmem:[%s264 + $0xb8] sm:$0xff]
        %v341 = vld [vmem:[%s264 + $0xc0] sm:$0xff]
        %v342 = vld [vmem:[%s264 + $0xc8] sm:$0xff]
        %v343 = vld [vmem:[%s264 + $0xd0] sm:$0xff]
        %v344 = vld [vmem:[%s264 + $0xd8] sm:$0xff]
        %v345 = vld [vmem:[%s264 + $0xe0] sm:$0xff]
        %v346 = vld [vmem:[%s264 + $0xe8] sm:$0xff]
        %v347 = vld [vmem:[%s264 + $0xf0] sm:$0xff]
        %v348 = vld [vmem:[%s264 + $0xf8] sm:$0xff]
        %v349 = vld [vmem:[%s2] sm:$0x1]
        %v351 = vlaneseq
        %v352 = vshrl.u32 %v351, 7
        %v353 = vsub.s32 0, %v352
        %v354 = vrot.slane %v349, %v353
        %v356 = vmul.f32 %v317, %v354
        %v357 = vmul.f32 %v318, %v354
        %v358 = vmul.f32 %v319, %v354
        %v359 = vmul.f32 %v320, %v354
        %v360 = vmul.f32 %v321, %v354
        %v361 = vmul.f32 %v322, %v354
        %v362 = vmul.f32 %v323, %v354
        %v363 = vmul.f32 %v324, %v354
        %v364 = vmul.f32 %v325, %v354
        %v365 = vmul.f32 %v326, %v354
        %v366 = vmul.f32 %v327, %v354
        %v367 = vmul.f32 %v328, %v354
        %v368 = vmul.f32 %v329, %v354
        %v369 = vmul.f32 %v330, %v354
        %v370 = vmul.f32 %v331, %v354
        %v371 = vmul.f32 %v332, %v354
        %v372 = vmul.f32 %v333, %v354
        %v373 = vmul.f32 %v334, %v354
        %v374 = vmul.f32 %v335, %v354
        %v375 = vmul.f32 %v336, %v354
        %v376 = vmul.f32 %v337, %v354
        %v377 = vmul.f32 %v338, %v354
        %v378 = vmul.f32 %v339, %v354
        %v379 = vmul.f32 %v340, %v354
        %v380 = vmul.f32 %v341, %v354
        %v381 = vmul.f32 %v342, %v354
        %v382 = vmul.f32 %v343, %v354
        %v383 = vmul.f32 %v344, %v354
        %v384 = vmul.f32 %v345, %v354
        %v385 = vmul.f32 %v346, %v354
        %v386 = vmul.f32 %v347, %v354
        %v387 = vmul.f32 %v348, %v354
        %v388 = vld [vmem:[%s3] sm:$0x1]
        %v390 = vlaneseq
        %v391 = vshrl.u32 %v390, 7
        %v392 = vsub.s32 0, %v391
        %v393 = vrot.slane %v388, %v392
        %v395 = vadd.f32 %v356, %v393
        %v396 = vadd.f32 %v357, %v393
        %v397 = vadd.f32 %v358, %v393
        %v398 = vadd.f32 %v359, %v393
        %v399 = vadd.f32 %v360, %v393
        %v400 = vadd.f32 %v361, %v393
        %v401 = vadd.f32 %v362, %v393
        %v402 = vadd.f32 %v363, %v393
        %v403 = vadd.f32 %v364, %v393
        %v404 = vadd.f32 %v365, %v393
        %v405 = vadd.f32 %v366, %v393
        %v406 = vadd.f32 %v367, %v393
        %v407 = vadd.f32 %v368, %v393
        %v408 = vadd.f32 %v369, %v393
        %v409 = vadd.f32 %v370, %v393
        %v410 = vadd.f32 %v371, %v393
        %v411 = vadd.f32 %v372, %v393
        %v412 = vadd.f32 %v373, %v393
        %v413 = vadd.f32 %v374, %v393
        %v414 = vadd.f32 %v375, %v393
        %v415 = vadd.f32 %v376, %v393
        %v416 = vadd.f32 %v377, %v393
        %v417 = vadd.f32 %v378, %v393
        %v418 = vadd.f32 %v379, %v393
        %v419 = vadd.f32 %v380, %v393
        %v420 = vadd.f32 %v381, %v393
        %v421 = vadd.f32 %v382, %v393
        %v422 = vadd.f32 %v383, %v393
        %v423 = vadd.f32 %v384, %v393
        %v424 = vadd.f32 %v385, %v393
        %v425 = vadd.f32 %v386, %v393
        %v426 = vadd.f32 %v387, %v393
        %v427 = vmax.f32 %v395, 0.0
        %v428 = vmax.f32 %v396, 0.0
        %v429 = vmax.f32 %v397, 0.0
        %v430 = vmax.f32 %v398, 0.0
        %v431 = vmax.f32 %v399, 0.0
        %v432 = vmax.f32 %v400, 0.0
        %v433 = vmax.f32 %v401, 0.0
        %v434 = vmax.f32 %v402, 0.0
        %v435 = vmax.f32 %v403, 0.0
        %v436 = vmax.f32 %v404, 0.0
        %v437 = vmax.f32 %v405, 0.0
        %v438 = vmax.f32 %v406, 0.0
        %v439 = vmax.f32 %v407, 0.0
        %v440 = vmax.f32 %v408, 0.0
        %v441 = vmax.f32 %v409, 0.0
        %v442 = vmax.f32 %v410, 0.0
        %v443 = vmax.f32 %v411, 0.0
        %v444 = vmax.f32 %v412, 0.0
        %v445 = vmax.f32 %v413, 0.0
        %v446 = vmax.f32 %v414, 0.0
        %v447 = vmax.f32 %v415, 0.0
        %v448 = vmax.f32 %v416, 0.0
        %v449 = vmax.f32 %v417, 0.0
        %v450 = vmax.f32 %v418, 0.0
        %v451 = vmax.f32 %v419, 0.0
        %v452 = vmax.f32 %v420, 0.0
        %v453 = vmax.f32 %v421, 0.0
        %v454 = vmax.f32 %v422, 0.0
        %v455 = vmax.f32 %v423, 0.0
        %v456 = vmax.f32 %v424, 0.0
        %v457 = vmax.f32 %v425, 0.0
        %v458 = vmax.f32 %v426, 0.0
        %v459 = vld [vmem:[%s269] sm:$0xf]
        %v460 = vld [vmem:[%s269 + $0x4] sm:$0xf]
        %v461 = vld [vmem:[%s269 + $0x8] sm:$0xf]
        %v462 = vld [vmem:[%s269 + $0xc] sm:$0xf]
        %v463 = vld [vmem:[%s269 + $0x10] sm:$0xf]
        %v464 = vld [vmem:[%s269 + $0x14] sm:$0xf]
        %v465 = vld [vmem:[%s269 + $0x18] sm:$0xf]
        %v466 = vld [vmem:[%s269 + $0x1c] sm:$0xf]
        %v467 = vld [vmem:[%s269 + $0x20] sm:$0xf]
        %v468 = vld [vmem:[%s269 + $0x24] sm:$0xf]
        %v469 = vld [vmem:[%s269 + $0x28] sm:$0xf]
        %v470 = vld [vmem:[%s269 + $0x2c] sm:$0xf]
        %v471 = vld [vmem:[%s269 + $0x30] sm:$0xf]
        %v472 = vld [vmem:[%s269 + $0x34] sm:$0xf]
        %v473 = vld [vmem:[%s269 + $0x38] sm:$0xf]
        %v474 = vld [vmem:[%s269 + $0x3c] sm:$0xf]
        %v475 = vld [vmem:[%s269 + $0x40] sm:$0xf]
        %v476 = vld [vmem:[%s269 + $0x44] sm:$0xf]
        %v477 = vld [vmem:[%s269 + $0x48] sm:$0xf]
        %v478 = vld [vmem:[%s269 + $0x4c] sm:$0xf]
        %v479 = vld [vmem:[%s269 + $0x50] sm:$0xf]
        %v480 = vld [vmem:[%s269 + $0x54] sm:$0xf]
        %v481 = vld [vmem:[%s269 + $0x58] sm:$0xf]
        %v482 = vld [vmem:[%s269 + $0x5c] sm:$0xf]
        %v483 = vld [vmem:[%s269 + $0x60] sm:$0xf]
        %v484 = vld [vmem:[%s269 + $0x64] sm:$0xf]
        %v485 = vld [vmem:[%s269 + $0x68] sm:$0xf]
        %v486 = vld [vmem:[%s269 + $0x6c] sm:$0xf]
        %v487 = vld [vmem:[%s269 + $0x70] sm:$0xf]
        %v488 = vld [vmem:[%s269 + $0x74] sm:$0xf]
        %v489 = vld [vmem:[%s269 + $0x78] sm:$0xf]
        %v490 = vld [vmem:[%s269 + $0x7c] sm:$0xf]
        %v491 = vunpack.c.l.bf16 %v459
        %v492 = vunpack.c.l.bf16 %v460
        %v493 = vunpack.c.l.bf16 %v461
        %v494 = vunpack.c.l.bf16 %v462
        %v495 = vunpack.c.l.bf16 %v463
        %v496 = vunpack.c.l.bf16 %v464
        %v497 = vunpack.c.l.bf16 %v465
        %v498 = vunpack.c.l.bf16 %v466
        %v499 = vunpack.c.l.bf16 %v467
        %v500 = vunpack.c.l.bf16 %v468
        %v501 = vunpack.c.l.bf16 %v469
        %v502 = vunpack.c.l.bf16 %v470
        %v503 = vunpack.c.l.bf16 %v471
        %v504 = vunpack.c.l.bf16 %v472
        %v505 = vunpack.c.l.bf16 %v473
        %v506 = vunpack.c.l.bf16 %v474
        %v507 = vunpack.c.l.bf16 %v475
        %v508 = vunpack.c.l.bf16 %v476
        %v509 = vunpack.c.l.bf16 %v477
        %v510 = vunpack.c.l.bf16 %v478
        %v511 = vunpack.c.l.bf16 %v479
        %v512 = vunpack.c.l.bf16 %v480
        %v513 = vunpack.c.l.bf16 %v481
        %v514 = vunpack.c.l.bf16 %v482
        %v515 = vunpack.c.l.bf16 %v483
        %v516 = vunpack.c.l.bf16 %v484
        %v517 = vunpack.c.l.bf16 %v485
        %v518 = vunpack.c.l.bf16 %v486
        %v519 = vunpack.c.l.bf16 %v487
        %v520 = vunpack.c.l.bf16 %v488
        %v521 = vunpack.c.l.bf16 %v489
        %v522 = vunpack.c.l.bf16 %v490
        %555 = vrot.lane.b32.xlu0 %v491, 4
        %v556 = vpop.permute.xlu0 %555
        %557 = vrot.lane.b32.xlu0 %v492, 4
        %v558 = vpop.permute.xlu0 %557
        %559 = vrot.lane.b32.xlu0 %v493, 4
        %v560 = vpop.permute.xlu0 %559
        %561 = vrot.lane.b32.xlu0 %v494, 4
        %v562 = vpop.permute.xlu0 %561
        %563 = vrot.lane.b32.xlu0 %v495, 4
        %v564 = vpop.permute.xlu0 %563
        %565 = vrot.lane.b32.xlu0 %v496, 4
        %v566 = vpop.permute.xlu0 %565
        %567 = vrot.lane.b32.xlu0 %v497, 4
        %v568 = vpop.permute.xlu0 %567
        %569 = vrot.lane.b32.xlu0 %v498, 4
        %v570 = vpop.permute.xlu0 %569
        %571 = vrot.lane.b32.xlu0 %v499, 4
        %v572 = vpop.permute.xlu0 %571
        %573 = vrot.lane.b32.xlu0 %v500, 4
        %v574 = vpop.permute.xlu0 %573
        %575 = vrot.lane.b32.xlu0 %v501, 4
        %v576 = vpop.permute.xlu0 %575
        %577 = vrot.lane.b32.xlu0 %v502, 4
        %v578 = vpop.permute.xlu0 %577
        %579 = vrot.lane.b32.xlu0 %v503, 4
        %v580 = vpop.permute.xlu0 %579
        %581 = vrot.lane.b32.xlu0 %v504, 4
        %v582 = vpop.permute.xlu0 %581
        %583 = vrot.lane.b32.xlu0 %v505, 4
        %v584 = vpop.permute.xlu0 %583
        %585 = vrot.lane.b32.xlu0 %v506, 4
        %v586 = vpop.permute.xlu0 %585
        %587 = vrot.lane.b32.xlu0 %v507, 4
        %v588 = vpop.permute.xlu0 %587
        %589 = vrot.lane.b32.xlu0 %v508, 4
        %v590 = vpop.permute.xlu0 %589
        %591 = vrot.lane.b32.xlu0 %v509, 4
        %v592 = vpop.permute.xlu0 %591
        %593 = vrot.lane.b32.xlu0 %v510, 4
        %v594 = vpop.permute.xlu0 %593
        %595 = vrot.lane.b32.xlu0 %v511, 4
        %v596 = vpop.permute.xlu0 %595
        %597 = vrot.lane.b32.xlu0 %v512, 4
        %v598 = vpop.permute.xlu0 %597
        %599 = vrot.lane.b32.xlu0 %v513, 4
        %v600 = vpop.permute.xlu0 %599
        %601 = vrot.lane.b32.xlu0 %v514, 4
        %v602 = vpop.permute.xlu0 %601
        %603 = vrot.lane.b32.xlu0 %v515, 4
        %v604 = vpop.permute.xlu0 %603
        %605 = vrot.lane.b32.xlu0 %v516, 4
        %v606 = vpop.permute.xlu0 %605
        %607 = vrot.lane.b32.xlu0 %v517, 4
        %v608 = vpop.permute.xlu0 %607
        %609 = vrot.lane.b32.xlu0 %v518, 4
        %v610 = vpop.permute.xlu0 %609
        %611 = vrot.lane.b32.xlu0 %v519, 4
        %v612 = vpop.permute.xlu0 %611
        %613 = vrot.lane.b32.xlu0 %v520, 4
        %v614 = vpop.permute.xlu0 %613
        %615 = vrot.lane.b32.xlu0 %v521, 4
        %v616 = vpop.permute.xlu0 %615
        %617 = vrot.lane.b32.xlu0 %v522, 4
        %v618 = vpop.permute.xlu0 %617
        %vm651 = vcmask 31744
        %v652 = vsel %vm651, %v427, %v556
        %v653 = vsel %vm651, %v428, %v558
        %v654 = vsel %vm651, %v429, %v560
        %v655 = vsel %vm651, %v430, %v562
        %v656 = vsel %vm651, %v431, %v564
        %v657 = vsel %vm651, %v432, %v566
        %v658 = vsel %vm651, %v433, %v568
        %v659 = vsel %vm651, %v434, %v570
        %v660 = vsel %vm651, %v435, %v572
        %v661 = vsel %vm651, %v436, %v574
        %v662 = vsel %vm651, %v437, %v576
        %v663 = vsel %vm651, %v438, %v578
        %v664 = vsel %vm651, %v439, %v580
        %v665 = vsel %vm651, %v440, %v582
        %v666 = vsel %vm651, %v441, %v584
        %v667 = vsel %vm651, %v442, %v586
        %v668 = vsel %vm651, %v443, %v588
        %v669 = vsel %vm651, %v444, %v590
        %v670 = vsel %vm651, %v445, %v592
        %v671 = vsel %vm651, %v446, %v594
        %v672 = vsel %vm651, %v447, %v596
        %v673 = vsel %vm651, %v448, %v598
        %v674 = vsel %vm651, %v449, %v600
        %v675 = vsel %vm651, %v450, %v602
        %v676 = vsel %vm651, %v451, %v604
        %v677 = vsel %vm651, %v452, %v606
        %v678 = vsel %vm651, %v453, %v608
        %v679 = vsel %vm651, %v454, %v610
        %v680 = vsel %vm651, %v455, %v612
        %v681 = vsel %vm651, %v456, %v614
        %v682 = vsel %vm651, %v457, %v616
        %v683 = vsel %vm651, %v458, %v618
        %s684 = scalar_lea.vmem [#allocation2], 24
        %685 = vst.msk [vmem:[%s684 + $0x1] sm:$0xff] %vm271, %v652
        %686 = vst.msk [vmem:[%s684 + $0x9] sm:$0xff] %vm271, %v653
        %687 = vst.msk [vmem:[%s684 + $0x19] sm:$0xff] %vm271, %v654
        %688 = vst.msk [vmem:[%s684 + $0x21] sm:$0xff] %vm271, %v655
        %689 = vst.msk [vmem:[%s684 + $0x31] sm:$0xff] %vm271, %v656
        %690 = vst.msk [vmem:[%s684 + $0x39] sm:$0xff] %vm271, %v657
        %691 = vst.msk [vmem:[%s684 + $0x49] sm:$0xff] %vm271, %v658
        %692 = vst.msk [vmem:[%s684 + $0x51] sm:$0xff] %vm271, %v659
        %693 = vst.msk [vmem:[%s684 + $0x61] sm:$0xff] %vm271, %v660
        %694 = vst.msk [vmem:[%s684 + $0x69] sm:$0xff] %vm271, %v661
        %695 = vst.msk [vmem:[%s684 + $0x79] sm:$0xff] %vm271, %v662
        %696 = vst.msk [vmem:[%s684 + $0x81] sm:$0xff] %vm271, %v663
        %697 = vst.msk [vmem:[%s684 + $0x91] sm:$0xff] %vm271, %v664
        %698 = vst.msk [vmem:[%s684 + $0x99] sm:$0xff] %vm271, %v665
        %699 = vst.msk [vmem:[%s684 + $0xa9] sm:$0xff] %vm271, %v666
        %700 = vst.msk [vmem:[%s684 + $0xb1] sm:$0xff] %vm271, %v667
        %701 = vst.msk [vmem:[%s684 + $0xc1] sm:$0xff] %vm271, %v668
        %702 = vst.msk [vmem:[%s684 + $0xc9] sm:$0xff] %vm271, %v669
        %703 = vst.msk [vmem:[%s684 + $0xd9] sm:$0xff] %vm271, %v670
        %704 = vst.msk [vmem:[%s684 + $0xe1] sm:$0xff] %vm271, %v671
        %705 = vst.msk [vmem:[%s684 + $0xf1] sm:$0xff] %vm271, %v672
        %706 = vst.msk [vmem:[%s684 + $0xf9] sm:$0xff] %vm271, %v673
        %707 = vst.msk [vmem:[%s684 + $0x109] sm:$0xff] %vm271, %v674
        %708 = vst.msk [vmem:[%s684 + $0x111] sm:$0xff] %vm271, %v675
        %709 = vst.msk [vmem:[%s684 + $0x121] sm:$0xff] %vm271, %v676
        %710 = vst.msk [vmem:[%s684 + $0x129] sm:$0xff] %vm271, %v677
        %711 = vst.msk [vmem:[%s684 + $0x139] sm:$0xff] %vm271, %v678
        %712 = vst.msk [vmem:[%s684 + $0x141] sm:$0xff] %vm271, %v679
        %713 = vst.msk [vmem:[%s684 + $0x151] sm:$0xff] %vm271, %v680
        %714 = vst.msk [vmem:[%s684 + $0x159] sm:$0xff] %vm271, %v681
        %715 = vst.msk [vmem:[%s684 + $0x169] sm:$0xff] %vm271, %v682
        %716 = vst.msk [vmem:[%s684 + $0x171] sm:$0xff] %vm271, %v683
        %v717 = vld [vmem:[#allocation2] sm:$0xff]
        %v718 = vld [vmem:[#allocation2 + $0x8] sm:$0xff]
        %v719 = vld [vmem:[#allocation2 + $0x18] sm:$0xff]
        %v720 = vld [vmem:[#allocation2 + $0x20] sm:$0xff]
        %v721 = vld [vmem:[#allocation2 + $0x30] sm:$0xff]
        %v722 = vld [vmem:[#allocation2 + $0x38] sm:$0xff]
        %v723 = vld [vmem:[#allocation2 + $0x48] sm:$0xff]
        %v724 = vld [vmem:[#allocation2 + $0x50] sm:$0xff]
        %v725 = vld [vmem:[#allocation2 + $0x60] sm:$0xff]
        %v726 = vld [vmem:[#allocation2 + $0x68] sm:$0xff]
        %v727 = vld [vmem:[#allocation2 + $0x78] sm:$0xff]
        %v728 = vld [vmem:[#allocation2 + $0x80] sm:$0xff]
        %v729 = vld [vmem:[#allocation2 + $0x90] sm:$0xff]
        %v730 = vld [vmem:[#allocation2 + $0x98] sm:$0xff]
        %v731 = vld [vmem:[#allocation2 + $0xa8] sm:$0xff]
        %v732 = vld [vmem:[#allocation2 + $0xb0] sm:$0xff]
        %v733 = vld [vmem:[#allocation2 + $0xc0] sm:$0xff]
        %v734 = vld [vmem:[#allocation2 + $0xc8] sm:$0xff]
        %v735 = vld [vmem:[#allocation2 + $0xd8] sm:$0xff]
        %v736 = vld [vmem:[#allocation2 + $0xe0] sm:$0xff]
        %v737 = vld [vmem:[#allocation2 + $0xf0] sm:$0xff]
        %v738 = vld [vmem:[#allocation2 + $0xf8] sm:$0xff]
        %v739 = vld [vmem:[#allocation2 + $0x108] sm:$0xff]
        %v740 = vld [vmem:[#allocation2 + $0x110] sm:$0xff]
        %v741 = vld [vmem:[#allocation2 + $0x120] sm:$0xff]
        %v742 = vld [vmem:[#allocation2 + $0x128] sm:$0xff]
        %v743 = vld [vmem:[#allocation2 + $0x138] sm:$0xff]
        %v744 = vld [vmem:[#allocation2 + $0x140] sm:$0xff]
        %v745 = vld [vmem:[#allocation2 + $0x150] sm:$0xff]
        %v746 = vld [vmem:[#allocation2 + $0x158] sm:$0xff]
        %v747 = vld [vmem:[#allocation2 + $0x168] sm:$0xff]
        %v748 = vld [vmem:[#allocation2 + $0x170] sm:$0xff]
        %v749 = vld [vmem:[#allocation2 + $0x1] sm:$0xff]
        %v750 = vld [vmem:[#allocation2 + $0x9] sm:$0xff]
        %v751 = vld [vmem:[#allocation2 + $0x19] sm:$0xff]
        %v752 = vld [vmem:[#allocation2 + $0x21] sm:$0xff]
        %v753 = vld [vmem:[#allocation2 + $0x31] sm:$0xff]
        %v754 = vld [vmem:[#allocation2 + $0x39] sm:$0xff]
        %v755 = vld [vmem:[#allocation2 + $0x49] sm:$0xff]
        %v756 = vld [vmem:[#allocation2 + $0x51] sm:$0xff]
        %v757 = vld [vmem:[#allocation2 + $0x61] sm:$0xff]
        %v758 = vld [vmem:[#allocation2 + $0x69] sm:$0xff]
        %v759 = vld [vmem:[#allocation2 + $0x79] sm:$0xff]
        %v760 = vld [vmem:[#allocation2 + $0x81] sm:$0xff]
        %v761 = vld [vmem:[#allocation2 + $0x91] sm:$0xff]
        %v762 = vld [vmem:[#allocation2 + $0x99] sm:$0xff]
        %v763 = vld [vmem:[#allocation2 + $0xa9] sm:$0xff]
        %v764 = vld [vmem:[#allocation2 + $0xb1] sm:$0xff]
        %v765 = vld [vmem:[#allocation2 + $0xc1] sm:$0xff]
        %v766 = vld [vmem:[#allocation2 + $0xc9] sm:$0xff]
        %v767 = vld [vmem:[#allocation2 + $0xd9] sm:$0xff]
        %v768 = vld [vmem:[#allocation2 + $0xe1] sm:$0xff]
        %v769 = vld [vmem:[#allocation2 + $0xf1] sm:$0xff]
        %v770 = vld [vmem:[#allocation2 + $0xf9] sm:$0xff]
        %v771 = vld [vmem:[#allocation2 + $0x109] sm:$0xff]
        %v772 = vld [vmem:[#allocation2 + $0x111] sm:$0xff]
        %v773 = vld [vmem:[#allocation2 + $0x121] sm:$0xff]
        %v774 = vld [vmem:[#allocation2 + $0x129] sm:$0xff]
        %v775 = vld [vmem:[#allocation2 + $0x139] sm:$0xff]
        %v776 = vld [vmem:[#allocation2 + $0x141] sm:$0xff]
        %v777 = vld [vmem:[#allocation2 + $0x151] sm:$0xff]
        %v778 = vld [vmem:[#allocation2 + $0x159] sm:$0xff]
        %v779 = vld [vmem:[#allocation2 + $0x169] sm:$0xff]
        %v780 = vld [vmem:[#allocation2 + $0x171] sm:$0xff]
        %v781 = vld [vmem:[#allocation2 + $0x2] sm:$0xff]
        %v782 = vld [vmem:[#allocation2 + $0xa] sm:$0xff]
        %v783 = vld [vmem:[#allocation2 + $0x1a] sm:$0xff]
        %v784 = vld [vmem:[#allocation2 + $0x22] sm:$0xff]
        %v785 = vld [vmem:[#allocation2 + $0x32] sm:$0xff]
        %v786 = vld [vmem:[#allocation2 + $0x3a] sm:$0xff]
        %v787 = vld [vmem:[#allocation2 + $0x4a] sm:$0xff]
        %v788 = vld [vmem:[#allocation2 + $0x52] sm:$0xff]
        %v789 = vld [vmem:[#allocation2 + $0x62] sm:$0xff]
        %v790 = vld [vmem:[#allocation2 + $0x6a] sm:$0xff]
        %v791 = vld [vmem:[#allocation2 + $0x7a] sm:$0xff]
        %v792 = vld [vmem:[#allocation2 + $0x82] sm:$0xff]
        %v793 = vld [vmem:[#allocation2 + $0x92] sm:$0xff]
        %v794 = vld [vmem:[#allocation2 + $0x9a] sm:$0xff]
        %v795 = vld [vmem:[#allocation2 + $0xaa] sm:$0xff]
        %v796 = vld [vmem:[#allocation2 + $0xb2] sm:$0xff]
        %v797 = vld [vmem:[#allocation2 + $0xc2] sm:$0xff]
        %v798 = vld [vmem:[#allocation2 + $0xca] sm:$0xff]
        %v799 = vld [vmem:[#allocation2 + $0xda] sm:$0xff]
        %v800 = vld [vmem:[#allocation2 + $0xe2] sm:$0xff]
        %v801 = vld [vmem:[#allocation2 + $0xf2] sm:$0xff]
        %v802 = vld [vmem:[#allocation2 + $0xfa] sm:$0xff]
        %v803 = vld [vmem:[#allocation2 + $0x10a] sm:$0xff]
        %v804 = vld [vmem:[#allocation2 + $0x112] sm:$0xff]
        %v805 = vld [vmem:[#allocation2 + $0x122] sm:$0xff]
        %v806 = vld [vmem:[#allocation2 + $0x12a] sm:$0xff]
        %v807 = vld [vmem:[#allocation2 + $0x13a] sm:$0xff]
        %v808 = vld [vmem:[#allocation2 + $0x142] sm:$0xff]
        %v809 = vld [vmem:[#allocation2 + $0x152] sm:$0xff]
        %v810 = vld [vmem:[#allocation2 + $0x15a] sm:$0xff]
        %v811 = vld [vmem:[#allocation2 + $0x16a] sm:$0xff]
        %v812 = vld [vmem:[#allocation2 + $0x172] sm:$0xff]
        %v813 = vld [vmem:[%s684] sm:$0xff]
        %v814 = vld [vmem:[%s684 + $0x8] sm:$0xff]
        %v815 = vld [vmem:[%s684 + $0x18] sm:$0xff]
        %v816 = vld [vmem:[%s684 + $0x20] sm:$0xff]
        %v817 = vld [vmem:[%s684 + $0x30] sm:$0xff]
        %v818 = vld [vmem:[%s684 + $0x38] sm:$0xff]
        %v819 = vld [vmem:[%s684 + $0x48] sm:$0xff]
        %v820 = vld [vmem:[%s684 + $0x50] sm:$0xff]
        %v821 = vld [vmem:[%s684 + $0x60] sm:$0xff]
        %v822 = vld [vmem:[%s684 + $0x68] sm:$0xff]
        %v823 = vld [vmem:[%s684 + $0x78] sm:$0xff]
        %v824 = vld [vmem:[%s684 + $0x80] sm:$0xff]
        %v825 = vld [vmem:[%s684 + $0x90] sm:$0xff]
        %v826 = vld [vmem:[%s684 + $0x98] sm:$0xff]
        %v827 = vld [vmem:[%s684 + $0xa8] sm:$0xff]
        %v828 = vld [vmem:[%s684 + $0xb0] sm:$0xff]
        %v829 = vld [vmem:[%s684 + $0xc0] sm:$0xff]
        %v830 = vld [vmem:[%s684 + $0xc8] sm:$0xff]
        %v831 = vld [vmem:[%s684 + $0xd8] sm:$0xff]
        %v832 = vld [vmem:[%s684 + $0xe0] sm:$0xff]
        %v833 = vld [vmem:[%s684 + $0xf0] sm:$0xff]
        %v834 = vld [vmem:[%s684 + $0xf8] sm:$0xff]
        %v835 = vld [vmem:[%s684 + $0x108] sm:$0xff]
        %v836 = vld [vmem:[%s684 + $0x110] sm:$0xff]
        %v837 = vld [vmem:[%s684 + $0x120] sm:$0xff]
        %v838 = vld [vmem:[%s684 + $0x128] sm:$0xff]
        %v839 = vld [vmem:[%s684 + $0x138] sm:$0xff]
        %v840 = vld [vmem:[%s684 + $0x140] sm:$0xff]
        %v841 = vld [vmem:[%s684 + $0x150] sm:$0xff]
        %v842 = vld [vmem:[%s684 + $0x158] sm:$0xff]
        %v843 = vld [vmem:[%s684 + $0x168] sm:$0xff]
        %v844 = vld [vmem:[%s684 + $0x170] sm:$0xff]
        %v845 = vld [vmem:[%s684 + $0x1] sm:$0xff]
        %v846 = vld [vmem:[%s684 + $0x9] sm:$0xff]
        %v847 = vld [vmem:[%s684 + $0x19] sm:$0xff]
        %v848 = vld [vmem:[%s684 + $0x21] sm:$0xff]
        %v849 = vld [vmem:[%s684 + $0x31] sm:$0xff]
        %v850 = vld [vmem:[%s684 + $0x39] sm:$0xff]
        %v851 = vld [vmem:[%s684 + $0x49] sm:$0xff]
        %v852 = vld [vmem:[%s684 + $0x51] sm:$0xff]
        %v853 = vld [vmem:[%s684 + $0x61] sm:$0xff]
        %v854 = vld [vmem:[%s684 + $0x69] sm:$0xff]
        %v855 = vld [vmem:[%s684 + $0x79] sm:$0xff]
        %v856 = vld [vmem:[%s684 + $0x81] sm:$0xff]
        %v857 = vld [vmem:[%s684 + $0x91] sm:$0xff]
        %v858 = vld [vmem:[%s684 + $0x99] sm:$0xff]
        %v859 = vld [vmem:[%s684 + $0xa9] sm:$0xff]
        %v860 = vld [vmem:[%s684 + $0xb1] sm:$0xff]
        %v861 = vld [vmem:[%s684 + $0xc1] sm:$0xff]
        %v862 = vld [vmem:[%s684 + $0xc9] sm:$0xff]
        %v863 = vld [vmem:[%s684 + $0xd9] sm:$0xff]
        %v864 = vld [vmem:[%s684 + $0xe1] sm:$0xff]
        %v865 = vld [vmem:[%s684 + $0xf1] sm:$0xff]
        %v866 = vld [vmem:[%s684 + $0xf9] sm:$0xff]
        %v867 = vld [vmem:[%s684 + $0x109] sm:$0xff]
        %v868 = vld [vmem:[%s684 + $0x111] sm:$0xff]
        %v869 = vld [vmem:[%s684 + $0x121] sm:$0xff]
        %v870 = vld [vmem:[%s684 + $0x129] sm:$0xff]
        %v871 = vld [vmem:[%s684 + $0x139] sm:$0xff]
        %v872 = vld [vmem:[%s684 + $0x141] sm:$0xff]
        %v873 = vld [vmem:[%s684 + $0x151] sm:$0xff]
        %v874 = vld [vmem:[%s684 + $0x159] sm:$0xff]
        %v875 = vld [vmem:[%s684 + $0x169] sm:$0xff]
        %v876 = vld [vmem:[%s684 + $0x171] sm:$0xff]
        %v877 = vld [vmem:[%s684 + $0x2] sm:$0xff]
        %v878 = vld [vmem:[%s684 + $0xa] sm:$0xff]
        %v879 = vld [vmem:[%s684 + $0x1a] sm:$0xff]
        %v880 = vld [vmem:[%s684 + $0x22] sm:$0xff]
        %v881 = vld [vmem:[%s684 + $0x32] sm:$0xff]
        %v882 = vld [vmem:[%s684 + $0x3a] sm:$0xff]
        %v883 = vld [vmem:[%s684 + $0x4a] sm:$0xff]
        %v884 = vld [vmem:[%s684 + $0x52] sm:$0xff]
        %v885 = vld [vmem:[%s684 + $0x62] sm:$0xff]
        %v886 = vld [vmem:[%s684 + $0x6a] sm:$0xff]
        %v887 = vld [vmem:[%s684 + $0x7a] sm:$0xff]
        %v888 = vld [vmem:[%s684 + $0x82] sm:$0xff]
        %v889 = vld [vmem:[%s684 + $0x92] sm:$0xff]
        %v890 = vld [vmem:[%s684 + $0x9a] sm:$0xff]
        %v891 = vld [vmem:[%s684 + $0xaa] sm:$0xff]
        %v892 = vld [vmem:[%s684 + $0xb2] sm:$0xff]
        %v893 = vld [vmem:[%s684 + $0xc2] sm:$0xff]
        %v894 = vld [vmem:[%s684 + $0xca] sm:$0xff]
        %v895 = vld [vmem:[%s684 + $0xda] sm:$0xff]
        %v896 = vld [vmem:[%s684 + $0xe2] sm:$0xff]
        %v897 = vld [vmem:[%s684 + $0xf2] sm:$0xff]
        %v898 = vld [vmem:[%s684 + $0xfa] sm:$0xff]
        %v899 = vld [vmem:[%s684 + $0x10a] sm:$0xff]
        %v900 = vld [vmem:[%s684 + $0x112] sm:$0xff]
        %v901 = vld [vmem:[%s684 + $0x122] sm:$0xff]
        %v902 = vld [vmem:[%s684 + $0x12a] sm:$0xff]
        %v903 = vld [vmem:[%s684 + $0x13a] sm:$0xff]
        %v904 = vld [vmem:[%s684 + $0x142] sm:$0xff]
        %v905 = vld [vmem:[%s684 + $0x152] sm:$0xff]
        %v906 = vld [vmem:[%s684 + $0x15a] sm:$0xff]
        %v907 = vld [vmem:[%s684 + $0x16a] sm:$0xff]
        %v908 = vld [vmem:[%s684 + $0x172] sm:$0xff]
        %s909 = scalar_lea.vmem [#allocation2], 48
        %v910 = vld [vmem:[%s909] sm:$0xff]
        %v911 = vld [vmem:[%s909 + $0x8] sm:$0xff]
        %v912 = vld [vmem:[%s909 + $0x18] sm:$0xff]
        %v913 = vld [vmem:[%s909 + $0x20] sm:$0xff]
        %v914 = vld [vmem:[%s909 + $0x30] sm:$0xff]
        %v915 = vld [vmem:[%s909 + $0x38] sm:$0xff]
        %v916 = vld [vmem:[%s909 + $0x48] sm:$0xff]
        %v917 = vld [vmem:[%s909 + $0x50] sm:$0xff]
        %v918 = vld [vmem:[%s909 + $0x60] sm:$0xff]
        %v919 = vld [vmem:[%s909 + $0x68] sm:$0xff]
        %v920 = vld [vmem:[%s909 + $0x78] sm:$0xff]
        %v921 = vld [vmem:[%s909 + $0x80] sm:$0xff]
        %v922 = vld [vmem:[%s909 + $0x90] sm:$0xff]
        %v923 = vld [vmem:[%s909 + $0x98] sm:$0xff]
        %v924 = vld [vmem:[%s909 + $0xa8] sm:$0xff]
        %v925 = vld [vmem:[%s909 + $0xb0] sm:$0xff]
        %v926 = vld [vmem:[%s909 + $0xc0] sm:$0xff]
        %v927 = vld [vmem:[%s909 + $0xc8] sm:$0xff]
        %v928 = vld [vmem:[%s909 + $0xd8] sm:$0xff]
        %v929 = vld [vmem:[%s909 + $0xe0] sm:$0xff]
        %v930 = vld [vmem:[%s909 + $0xf0] sm:$0xff]
        %v931 = vld [vmem:[%s909 + $0xf8] sm:$0xff]
        %v932 = vld [vmem:[%s909 + $0x108] sm:$0xff]
        %v933 = vld [vmem:[%s909 + $0x110] sm:$0xff]
        %v934 = vld [vmem:[%s909 + $0x120] sm:$0xff]
        %v935 = vld [vmem:[%s909 + $0x128] sm:$0xff]
        %v936 = vld [vmem:[%s909 + $0x138] sm:$0xff]
        %v937 = vld [vmem:[%s909 + $0x140] sm:$0xff]
        %v938 = vld [vmem:[%s909 + $0x150] sm:$0xff]
        %v939 = vld [vmem:[%s909 + $0x158] sm:$0xff]
        %v940 = vld [vmem:[%s909 + $0x168] sm:$0xff]
        %v941 = vld [vmem:[%s909 + $0x170] sm:$0xff]
        %v942 = vld [vmem:[%s909 + $0x1] sm:$0xff]
        %v943 = vld [vmem:[%s909 + $0x9] sm:$0xff]
        %v944 = vld [vmem:[%s909 + $0x19] sm:$0xff]
        %v945 = vld [vmem:[%s909 + $0x21] sm:$0xff]
        %v946 = vld [vmem:[%s909 + $0x31] sm:$0xff]
        %v947 = vld [vmem:[%s909 + $0x39] sm:$0xff]
        %v948 = vld [vmem:[%s909 + $0x49] sm:$0xff]
        %v949 = vld [vmem:[%s909 + $0x51] sm:$0xff]
        %v950 = vld [vmem:[%s909 + $0x61] sm:$0xff]
        %v951 = vld [vmem:[%s909 + $0x69] sm:$0xff]
        %v952 = vld [vmem:[%s909 + $0x79] sm:$0xff]
        %v953 = vld [vmem:[%s909 + $0x81] sm:$0xff]
        %v954 = vld [vmem:[%s909 + $0x91] sm:$0xff]
        %v955 = vld [vmem:[%s909 + $0x99] sm:$0xff]
        %v956 = vld [vmem:[%s909 + $0xa9] sm:$0xff]
        %v957 = vld [vmem:[%s909 + $0xb1] sm:$0xff]
        %v958 = vld [vmem:[%s909 + $0xc1] sm:$0xff]
        %v959 = vld [vmem:[%s909 + $0xc9] sm:$0xff]
        %v960 = vld [vmem:[%s909 + $0xd9] sm:$0xff]
        %v961 = vld [vmem:[%s909 + $0xe1] sm:$0xff]
        %v962 = vld [vmem:[%s909 + $0xf1] sm:$0xff]
        %v963 = vld [vmem:[%s909 + $0xf9] sm:$0xff]
        %v964 = vld [vmem:[%s909 + $0x109] sm:$0xff]
        %v965 = vld [vmem:[%s909 + $0x111] sm:$0xff]
        %v966 = vld [vmem:[%s909 + $0x121] sm:$0xff]
        %v967 = vld [vmem:[%s909 + $0x129] sm:$0xff]
        %v968 = vld [vmem:[%s909 + $0x139] sm:$0xff]
        %v969 = vld [vmem:[%s909 + $0x141] sm:$0xff]
        %v970 = vld [vmem:[%s909 + $0x151] sm:$0xff]
        %v971 = vld [vmem:[%s909 + $0x159] sm:$0xff]
        %v972 = vld [vmem:[%s909 + $0x169] sm:$0xff]
        %v973 = vld [vmem:[%s909 + $0x171] sm:$0xff]
        %v974 = vld [vmem:[%s909 + $0x2] sm:$0xff]
        %v975 = vld [vmem:[%s909 + $0xa] sm:$0xff]
        %v976 = vld [vmem:[%s909 + $0x1a] sm:$0xff]
        %v977 = vld [vmem:[%s909 + $0x22] sm:$0xff]
        %v978 = vld [vmem:[%s909 + $0x32] sm:$0xff]
        %v979 = vld [vmem:[%s909 + $0x3a] sm:$0xff]
        %v980 = vld [vmem:[%s909 + $0x4a] sm:$0xff]
        %v981 = vld [vmem:[%s909 + $0x52] sm:$0xff]
        %v982 = vld [vmem:[%s909 + $0x62] sm:$0xff]
        %v983 = vld [vmem:[%s909 + $0x6a] sm:$0xff]
        %v984 = vld [vmem:[%s909 + $0x7a] sm:$0xff]
        %v985 = vld [vmem:[%s909 + $0x82] sm:$0xff]
        %v986 = vld [vmem:[%s909 + $0x92] sm:$0xff]
        %v987 = vld [vmem:[%s909 + $0x9a] sm:$0xff]
        %v988 = vld [vmem:[%s909 + $0xaa] sm:$0xff]
        %v989 = vld [vmem:[%s909 + $0xb2] sm:$0xff]
        %v990 = vld [vmem:[%s909 + $0xc2] sm:$0xff]
        %v991 = vld [vmem:[%s909 + $0xca] sm:$0xff]
        %v992 = vld [vmem:[%s909 + $0xda] sm:$0xff]
        %v993 = vld [vmem:[%s909 + $0xe2] sm:$0xff]
        %v994 = vld [vmem:[%s909 + $0xf2] sm:$0xff]
        %v995 = vld [vmem:[%s909 + $0xfa] sm:$0xff]
        %v996 = vld [vmem:[%s909 + $0x10a] sm:$0xff]
        %v997 = vld [vmem:[%s909 + $0x112] sm:$0xff]
        %v998 = vld [vmem:[%s909 + $0x122] sm:$0xff]
        %v999 = vld [vmem:[%s909 + $0x12a] sm:$0xff]
        %v1000 = vld [vmem:[%s909 + $0x13a] sm:$0xff]
        %v1001 = vld [vmem:[%s909 + $0x142] sm:$0xff]
        %v1002 = vld [vmem:[%s909 + $0x152] sm:$0xff]
        %v1003 = vld [vmem:[%s909 + $0x15a] sm:$0xff]
        %v1004 = vld [vmem:[%s909 + $0x16a] sm:$0xff]
        %v1005 = vld [vmem:[%s909 + $0x172] sm:$0xff]
        %1038 = vrot.lane.b32.xlu0 %v749, 8
        %v1039 = vpop.permute.xlu0 %1038
        %1040 = vrot.lane.b32.xlu0 %v750, 8
        %v1041 = vpop.permute.xlu0 %1040
        %1042 = vrot.lane.b32.xlu0 %v751, 8
        %v1043 = vpop.permute.xlu0 %1042
        %1044 = vrot.lane.b32.xlu0 %v752, 8
        %v1045 = vpop.permute.xlu0 %1044
        %1046 = vrot.lane.b32.xlu0 %v753, 8
        %v1047 = vpop.permute.xlu0 %1046
        %1048 = vrot.lane.b32.xlu0 %v754, 8
        %v1049 = vpop.permute.xlu0 %1048
        %1050 = vrot.lane.b32.xlu0 %v755, 8
        %v1051 = vpop.permute.xlu0 %1050
        %1052 = vrot.lane.b32.xlu0 %v756, 8
        %v1053 = vpop.permute.xlu0 %1052
        %1054 = vrot.lane.b32.xlu0 %v757, 8
        %v1055 = vpop.permute.xlu0 %1054
        %1056 = vrot.lane.b32.xlu0 %v758, 8
        %v1057 = vpop.permute.xlu0 %1056
        %1058 = vrot.lane.b32.xlu0 %v759, 8
        %v1059 = vpop.permute.xlu0 %1058
        %1060 = vrot.lane.b32.xlu0 %v760, 8
        %v1061 = vpop.permute.xlu0 %1060
        %1062 = vrot.lane.b32.xlu0 %v761, 8
        %v1063 = vpop.permute.xlu0 %1062
        %1064 = vrot.lane.b32.xlu0 %v762, 8
        %v1065 = vpop.permute.xlu0 %1064
        %1066 = vrot.lane.b32.xlu0 %v763, 8
        %v1067 = vpop.permute.xlu0 %1066
        %1068 = vrot.lane.b32.xlu0 %v764, 8
        %v1069 = vpop.permute.xlu0 %1068
        %1070 = vrot.lane.b32.xlu0 %v765, 8
        %v1071 = vpop.permute.xlu0 %1070
        %1072 = vrot.lane.b32.xlu0 %v766, 8
        %v1073 = vpop.permute.xlu0 %1072
        %1074 = vrot.lane.b32.xlu0 %v767, 8
        %v1075 = vpop.permute.xlu0 %1074
        %1076 = vrot.lane.b32.xlu0 %v768, 8
        %v1077 = vpop.permute.xlu0 %1076
        %1078 = vrot.lane.b32.xlu0 %v769, 8
        %v1079 = vpop.permute.xlu0 %1078
        %1080 = vrot.lane.b32.xlu0 %v770, 8
        %v1081 = vpop.permute.xlu0 %1080
        %1082 = vrot.lane.b32.xlu0 %v771, 8
        %v1083 = vpop.permute.xlu0 %1082
        %1084 = vrot.lane.b32.xlu0 %v772, 8
        %v1085 = vpop.permute.xlu0 %1084
        %1086 = vrot.lane.b32.xlu0 %v773, 8
        %v1087 = vpop.permute.xlu0 %1086
        %1088 = vrot.lane.b32.xlu0 %v774, 8
        %v1089 = vpop.permute.xlu0 %1088
        %1090 = vrot.lane.b32.xlu0 %v775, 8
        %v1091 = vpop.permute.xlu0 %1090
        %1092 = vrot.lane.b32.xlu0 %v776, 8
        %v1093 = vpop.permute.xlu0 %1092
        %1094 = vrot.lane.b32.xlu0 %v777, 8
        %v1095 = vpop.permute.xlu0 %1094
        %1096 = vrot.lane.b32.xlu0 %v778, 8
        %v1097 = vpop.permute.xlu0 %1096
        %1098 = vrot.lane.b32.xlu0 %v779, 8
        %v1099 = vpop.permute.xlu0 %1098
        %1100 = vrot.lane.b32.xlu0 %v780, 8
        %v1101 = vpop.permute.xlu0 %1100
        %1166 = vrot.lane.b32.xlu0 %v781, 16
        %v1167 = vpop.permute.xlu0 %1166
        %1168 = vrot.lane.b32.xlu0 %v782, 16
        %v1169 = vpop.permute.xlu0 %1168
        %1170 = vrot.lane.b32.xlu0 %v783, 16
        %v1171 = vpop.permute.xlu0 %1170
        %1172 = vrot.lane.b32.xlu0 %v784, 16
        %v1173 = vpop.permute.xlu0 %1172
        %1174 = vrot.lane.b32.xlu0 %v785, 16
        %v1175 = vpop.permute.xlu0 %1174
        %1176 = vrot.lane.b32.xlu0 %v786, 16
        %v1177 = vpop.permute.xlu0 %1176
        %1178 = vrot.lane.b32.xlu0 %v787, 16
        %v1179 = vpop.permute.xlu0 %1178
        %1180 = vrot.lane.b32.xlu0 %v788, 16
        %v1181 = vpop.permute.xlu0 %1180
        %1182 = vrot.lane.b32.xlu0 %v789, 16
        %v1183 = vpop.permute.xlu0 %1182
        %1184 = vrot.lane.b32.xlu0 %v790, 16
        %v1185 = vpop.permute.xlu0 %1184
        %1186 = vrot.lane.b32.xlu0 %v791, 16
        %v1187 = vpop.permute.xlu0 %1186
        %1188 = vrot.lane.b32.xlu0 %v792, 16
        %v1189 = vpop.permute.xlu0 %1188
        %1190 = vrot.lane.b32.xlu0 %v793, 16
        %v1191 = vpop.permute.xlu0 %1190
        %1192 = vrot.lane.b32.xlu0 %v794, 16
        %v1193 = vpop.permute.xlu0 %1192
        %1194 = vrot.lane.b32.xlu0 %v795, 16
        %v1195 = vpop.permute.xlu0 %1194
        %1196 = vrot.lane.b32.xlu0 %v796, 16
        %v1197 = vpop.permute.xlu0 %1196
        %1198 = vrot.lane.b32.xlu0 %v797, 16
        %v1199 = vpop.permute.xlu0 %1198
        %1200 = vrot.lane.b32.xlu0 %v798, 16
        %v1201 = vpop.permute.xlu0 %1200
        %1202 = vrot.lane.b32.xlu0 %v799, 16
        %v1203 = vpop.permute.xlu0 %1202
        %1204 = vrot.lane.b32.xlu0 %v800, 16
        %v1205 = vpop.permute.xlu0 %1204
        %1206 = vrot.lane.b32.xlu0 %v801, 16
        %v1207 = vpop.permute.xlu0 %1206
        %1208 = vrot.lane.b32.xlu0 %v802, 16
        %v1209 = vpop.permute.xlu0 %1208
        %1210 = vrot.lane.b32.xlu0 %v803, 16
        %v1211 = vpop.permute.xlu0 %1210
        %1212 = vrot.lane.b32.xlu0 %v804, 16
        %v1213 = vpop.permute.xlu0 %1212
        %1214 = vrot.lane.b32.xlu0 %v805, 16
        %v1215 = vpop.permute.xlu0 %1214
        %1216 = vrot.lane.b32.xlu0 %v806, 16
        %v1217 = vpop.permute.xlu0 %1216
        %1218 = vrot.lane.b32.xlu0 %v807, 16
        %v1219 = vpop.permute.xlu0 %1218
        %1220 = vrot.lane.b32.xlu0 %v808, 16
        %v1221 = vpop.permute.xlu0 %1220
        %1222 = vrot.lane.b32.xlu0 %v809, 16
        %v1223 = vpop.permute.xlu0 %1222
        %1224 = vrot.lane.b32.xlu0 %v810, 16
        %v1225 = vpop.permute.xlu0 %1224
        %1226 = vrot.lane.b32.xlu0 %v811, 16
        %v1227 = vpop.permute.xlu0 %1226
        %1228 = vrot.lane.b32.xlu0 %v812, 16
        %v1229 = vpop.permute.xlu0 %1228
        %1294 = vrot.lane.b32.xlu0 %v813, 24
        %v1295 = vpop.permute.xlu0 %1294
        %1296 = vrot.lane.b32.xlu0 %v814, 24
        %v1297 = vpop.permute.xlu0 %1296
        %1298 = vrot.lane.b32.xlu0 %v815, 24
        %v1299 = vpop.permute.xlu0 %1298
        %1300 = vrot.lane.b32.xlu0 %v816, 24
        %v1301 = vpop.permute.xlu0 %1300
        %1302 = vrot.lane.b32.xlu0 %v817, 24
        %v1303 = vpop.permute.xlu0 %1302
        %1304 = vrot.lane.b32.xlu0 %v818, 24
        %v1305 = vpop.permute.xlu0 %1304
        %1306 = vrot.lane.b32.xlu0 %v819, 24
        %v1307 = vpop.permute.xlu0 %1306
        %1308 = vrot.lane.b32.xlu0 %v820, 24
        %v1309 = vpop.permute.xlu0 %1308
        %1310 = vrot.lane.b32.xlu0 %v821, 24
        %v1311 = vpop.permute.xlu0 %1310
        %1312 = vrot.lane.b32.xlu0 %v822, 24
        %v1313 = vpop.permute.xlu0 %1312
        %1314 = vrot.lane.b32.xlu0 %v823, 24
        %v1315 = vpop.permute.xlu0 %1314
        %1316 = vrot.lane.b32.xlu0 %v824, 24
        %v1317 = vpop.permute.xlu0 %1316
        %1318 = vrot.lane.b32.xlu0 %v825, 24
        %v1319 = vpop.permute.xlu0 %1318
        %1320 = vrot.lane.b32.xlu0 %v826, 24
        %v1321 = vpop.permute.xlu0 %1320
        %1322 = vrot.lane.b32.xlu0 %v827, 24
        %v1323 = vpop.permute.xlu0 %1322
        %1324 = vrot.lane.b32.xlu0 %v828, 24
        %v1325 = vpop.permute.xlu0 %1324
        %1326 = vrot.lane.b32.xlu0 %v829, 24
        %v1327 = vpop.permute.xlu0 %1326
        %1328 = vrot.lane.b32.xlu0 %v830, 24
        %v1329 = vpop.permute.xlu0 %1328
        %1330 = vrot.lane.b32.xlu0 %v831, 24
        %v1331 = vpop.permute.xlu0 %1330
        %1332 = vrot.lane.b32.xlu0 %v832, 24
        %v1333 = vpop.permute.xlu0 %1332
        %1334 = vrot.lane.b32.xlu0 %v833, 24
        %v1335 = vpop.permute.xlu0 %1334
        %1336 = vrot.lane.b32.xlu0 %v834, 24
        %v1337 = vpop.permute.xlu0 %1336
        %1338 = vrot.lane.b32.xlu0 %v835, 24
        %v1339 = vpop.permute.xlu0 %1338
        %1340 = vrot.lane.b32.xlu0 %v836, 24
        %v1341 = vpop.permute.xlu0 %1340
        %1342 = vrot.lane.b32.xlu0 %v837, 24
        %v1343 = vpop.permute.xlu0 %1342
        %1344 = vrot.lane.b32.xlu0 %v838, 24
        %v1345 = vpop.permute.xlu0 %1344
        %1346 = vrot.lane.b32.xlu0 %v839, 24
        %v1347 = vpop.permute.xlu0 %1346
        %1348 = vrot.lane.b32.xlu0 %v840, 24
        %v1349 = vpop.permute.xlu0 %1348
        %1350 = vrot.lane.b32.xlu0 %v841, 24
        %v1351 = vpop.permute.xlu0 %1350
        %1352 = vrot.lane.b32.xlu0 %v842, 24
        %v1353 = vpop.permute.xlu0 %1352
        %1354 = vrot.lane.b32.xlu0 %v843, 24
        %v1355 = vpop.permute.xlu0 %1354
        %1356 = vrot.lane.b32.xlu0 %v844, 24
        %v1357 = vpop.permute.xlu0 %1356
        %1422 = vrot.lane.b32.xlu0 %v845, 32
        %v1423 = vpop.permute.xlu0 %1422
        %1424 = vrot.lane.b32.xlu0 %v846, 32
        %v1425 = vpop.permute.xlu0 %1424
        %1426 = vrot.lane.b32.xlu0 %v847, 32
        %v1427 = vpop.permute.xlu0 %1426
        %1428 = vrot.lane.b32.xlu0 %v848, 32
        %v1429 = vpop.permute.xlu0 %1428
        %1430 = vrot.lane.b32.xlu0 %v849, 32
        %v1431 = vpop.permute.xlu0 %1430
        %1432 = vrot.lane.b32.xlu0 %v850, 32
        %v1433 = vpop.permute.xlu0 %1432
        %1434 = vrot.lane.b32.xlu0 %v851, 32
        %v1435 = vpop.permute.xlu0 %1434
        %1436 = vrot.lane.b32.xlu0 %v852, 32
        %v1437 = vpop.permute.xlu0 %1436
        %1438 = vrot.lane.b32.xlu0 %v853, 32
        %v1439 = vpop.permute.xlu0 %1438
        %1440 = vrot.lane.b32.xlu0 %v854, 32
        %v1441 = vpop.permute.xlu0 %1440
        %1442 = vrot.lane.b32.xlu0 %v855, 32
        %v1443 = vpop.permute.xlu0 %1442
        %1444 = vrot.lane.b32.xlu0 %v856, 32
        %v1445 = vpop.permute.xlu0 %1444
        %1446 = vrot.lane.b32.xlu0 %v857, 32
        %v1447 = vpop.permute.xlu0 %1446
        %1448 = vrot.lane.b32.xlu0 %v858, 32
        %v1449 = vpop.permute.xlu0 %1448
        %1450 = vrot.lane.b32.xlu0 %v859, 32
        %v1451 = vpop.permute.xlu0 %1450
        %1452 = vrot.lane.b32.xlu0 %v860, 32
        %v1453 = vpop.permute.xlu0 %1452
        %1454 = vrot.lane.b32.xlu0 %v861, 32
        %v1455 = vpop.permute.xlu0 %1454
        %1456 = vrot.lane.b32.xlu0 %v862, 32
        %v1457 = vpop.permute.xlu0 %1456
        %1458 = vrot.lane.b32.xlu0 %v863, 32
        %v1459 = vpop.permute.xlu0 %1458
        %1460 = vrot.lane.b32.xlu0 %v864, 32
        %v1461 = vpop.permute.xlu0 %1460
        %1462 = vrot.lane.b32.xlu0 %v865, 32
        %v1463 = vpop.permute.xlu0 %1462
        %1464 = vrot.lane.b32.xlu0 %v866, 32
        %v1465 = vpop.permute.xlu0 %1464
        %1466 = vrot.lane.b32.xlu0 %v867, 32
        %v1467 = vpop.permute.xlu0 %1466
        %1468 = vrot.lane.b32.xlu0 %v868, 32
        %v1469 = vpop.permute.xlu0 %1468
        %1470 = vrot.lane.b32.xlu0 %v869, 32
        %v1471 = vpop.permute.xlu0 %1470
        %1472 = vrot.lane.b32.xlu0 %v870, 32
        %v1473 = vpop.permute.xlu0 %1472
        %1474 = vrot.lane.b32.xlu0 %v871, 32
        %v1475 = vpop.permute.xlu0 %1474
        %1476 = vrot.lane.b32.xlu0 %v872, 32
        %v1477 = vpop.permute.xlu0 %1476
        %1478 = vrot.lane.b32.xlu0 %v873, 32
        %v1479 = vpop.permute.xlu0 %1478
        %1480 = vrot.lane.b32.xlu0 %v874, 32
        %v1481 = vpop.permute.xlu0 %1480
        %1482 = vrot.lane.b32.xlu0 %v875, 32
        %v1483 = vpop.permute.xlu0 %1482
        %1484 = vrot.lane.b32.xlu0 %v876, 32
        %v1485 = vpop.permute.xlu0 %1484
        %1550 = vrot.lane.b32.xlu0 %v877, 40
        %v1551 = vpop.permute.xlu0 %1550
        %1552 = vrot.lane.b32.xlu0 %v878, 40
        %v1553 = vpop.permute.xlu0 %1552
        %1554 = vrot.lane.b32.xlu0 %v879, 40
        %v1555 = vpop.permute.xlu0 %1554
        %1556 = vrot.lane.b32.xlu0 %v880, 40
        %v1557 = vpop.permute.xlu0 %1556
        %1558 = vrot.lane.b32.xlu0 %v881, 40
        %v1559 = vpop.permute.xlu0 %1558
        %1560 = vrot.lane.b32.xlu0 %v882, 40
        %v1561 = vpop.permute.xlu0 %1560
        %1562 = vrot.lane.b32.xlu0 %v883, 40
        %v1563 = vpop.permute.xlu0 %1562
        %1564 = vrot.lane.b32.xlu0 %v884, 40
        %v1565 = vpop.permute.xlu0 %1564
        %1566 = vrot.lane.b32.xlu0 %v885, 40
        %v1567 = vpop.permute.xlu0 %1566
        %1568 = vrot.lane.b32.xlu0 %v886, 40
        %v1569 = vpop.permute.xlu0 %1568
        %1570 = vrot.lane.b32.xlu0 %v887, 40
        %v1571 = vpop.permute.xlu0 %1570
        %1572 = vrot.lane.b32.xlu0 %v888, 40
        %v1573 = vpop.permute.xlu0 %1572
        %1574 = vrot.lane.b32.xlu0 %v889, 40
        %v1575 = vpop.permute.xlu0 %1574
        %1576 = vrot.lane.b32.xlu0 %v890, 40
        %v1577 = vpop.permute.xlu0 %1576
        %1578 = vrot.lane.b32.xlu0 %v891, 40
        %v1579 = vpop.permute.xlu0 %1578
        %1580 = vrot.lane.b32.xlu0 %v892, 40
        %v1581 = vpop.permute.xlu0 %1580
        %1582 = vrot.lane.b32.xlu0 %v893, 40
        %v1583 = vpop.permute.xlu0 %1582
        %1584 = vrot.lane.b32.xlu0 %v894, 40
        %v1585 = vpop.permute.xlu0 %1584
        %1586 = vrot.lane.b32.xlu0 %v895, 40
        %v1587 = vpop.permute.xlu0 %1586
        %1588 = vrot.lane.b32.xlu0 %v896, 40
        %v1589 = vpop.permute.xlu0 %1588
        %1590 = vrot.lane.b32.xlu0 %v897, 40
        %v1591 = vpop.permute.xlu0 %1590
        %1592 = vrot.lane.b32.xlu0 %v898, 40
        %v1593 = vpop.permute.xlu0 %1592
        %1594 = vrot.lane.b32.xlu0 %v899, 40
        %v1595 = vpop.permute.xlu0 %1594
        %1596 = vrot.lane.b32.xlu0 %v900, 40
        %v1597 = vpop.permute.xlu0 %1596
        %1598 = vrot.lane.b32.xlu0 %v901, 40
        %v1599 = vpop.permute.xlu0 %1598
        %1600 = vrot.lane.b32.xlu0 %v902, 40
        %v1601 = vpop.permute.xlu0 %1600
        %1602 = vrot.lane.b32.xlu0 %v903, 40
        %v1603 = vpop.permute.xlu0 %1602
        %1604 = vrot.lane.b32.xlu0 %v904, 40
        %v1605 = vpop.permute.xlu0 %1604
        %1606 = vrot.lane.b32.xlu0 %v905, 40
        %v1607 = vpop.permute.xlu0 %1606
        %1608 = vrot.lane.b32.xlu0 %v906, 40
        %v1609 = vpop.permute.xlu0 %1608
        %1610 = vrot.lane.b32.xlu0 %v907, 40
        %v1611 = vpop.permute.xlu0 %1610
        %1612 = vrot.lane.b32.xlu0 %v908, 40
        %v1613 = vpop.permute.xlu0 %1612
        %1678 = vrot.lane.b32.xlu0 %v910, 48
        %v1679 = vpop.permute.xlu0 %1678
        %1680 = vrot.lane.b32.xlu0 %v911, 48
        %v1681 = vpop.permute.xlu0 %1680
        %1682 = vrot.lane.b32.xlu0 %v912, 48
        %v1683 = vpop.permute.xlu0 %1682
        %1684 = vrot.lane.b32.xlu0 %v913, 48
        %v1685 = vpop.permute.xlu0 %1684
        %1686 = vrot.lane.b32.xlu0 %v914, 48
        %v1687 = vpop.permute.xlu0 %1686
        %1688 = vrot.lane.b32.xlu0 %v915, 48
        %v1689 = vpop.permute.xlu0 %1688
        %1690 = vrot.lane.b32.xlu0 %v916, 48
        %v1691 = vpop.permute.xlu0 %1690
        %1692 = vrot.lane.b32.xlu0 %v917, 48
        %v1693 = vpop.permute.xlu0 %1692
        %1694 = vrot.lane.b32.xlu0 %v918, 48
        %v1695 = vpop.permute.xlu0 %1694
        %1696 = vrot.lane.b32.xlu0 %v919, 48
        %v1697 = vpop.permute.xlu0 %1696
        %1698 = vrot.lane.b32.xlu0 %v920, 48
        %v1699 = vpop.permute.xlu0 %1698
        %1700 = vrot.lane.b32.xlu0 %v921, 48
        %v1701 = vpop.permute.xlu0 %1700
        %1702 = vrot.lane.b32.xlu0 %v922, 48
        %v1703 = vpop.permute.xlu0 %1702
        %1704 = vrot.lane.b32.xlu0 %v923, 48
        %v1705 = vpop.permute.xlu0 %1704
        %1706 = vrot.lane.b32.xlu0 %v924, 48
        %v1707 = vpop.permute.xlu0 %1706
        %1708 = vrot.lane.b32.xlu0 %v925, 48
        %v1709 = vpop.permute.xlu0 %1708
        %1710 = vrot.lane.b32.xlu0 %v926, 48
        %v1711 = vpop.permute.xlu0 %1710
        %1712 = vrot.lane.b32.xlu0 %v927, 48
        %v1713 = vpop.permute.xlu0 %1712
        %1714 = vrot.lane.b32.xlu0 %v928, 48
        %v1715 = vpop.permute.xlu0 %1714
        %1716 = vrot.lane.b32.xlu0 %v929, 48
        %v1717 = vpop.permute.xlu0 %1716
        %1718 = vrot.lane.b32.xlu0 %v930, 48
        %v1719 = vpop.permute.xlu0 %1718
        %1720 = vrot.lane.b32.xlu0 %v931, 48
        %v1721 = vpop.permute.xlu0 %1720
        %1722 = vrot.lane.b32.xlu0 %v932, 48
        %v1723 = vpop.permute.xlu0 %1722
        %1724 = vrot.lane.b32.xlu0 %v933, 48
        %v1725 = vpop.permute.xlu0 %1724
        %1726 = vrot.lane.b32.xlu0 %v934, 48
        %v1727 = vpop.permute.xlu0 %1726
        %1728 = vrot.lane.b32.xlu0 %v935, 48
        %v1729 = vpop.permute.xlu0 %1728
        %1730 = vrot.lane.b32.xlu0 %v936, 48
        %v1731 = vpop.permute.xlu0 %1730
        %1732 = vrot.lane.b32.xlu0 %v937, 48
        %v1733 = vpop.permute.xlu0 %1732
        %1734 = vrot.lane.b32.xlu0 %v938, 48
        %v1735 = vpop.permute.xlu0 %1734
        %1736 = vrot.lane.b32.xlu0 %v939, 48
        %v1737 = vpop.permute.xlu0 %1736
        %1738 = vrot.lane.b32.xlu0 %v940, 48
        %v1739 = vpop.permute.xlu0 %1738
        %1740 = vrot.lane.b32.xlu0 %v941, 48
        %v1741 = vpop.permute.xlu0 %1740
        %1806 = vrot.lane.b32.xlu0 %v942, 56
        %v1807 = vpop.permute.xlu0 %1806
        %1808 = vrot.lane.b32.xlu0 %v943, 56
        %v1809 = vpop.permute.xlu0 %1808
        %1810 = vrot.lane.b32.xlu0 %v944, 56
        %v1811 = vpop.permute.xlu0 %1810
        %1812 = vrot.lane.b32.xlu0 %v945, 56
        %v1813 = vpop.permute.xlu0 %1812
        %1814 = vrot.lane.b32.xlu0 %v946, 56
        %v1815 = vpop.permute.xlu0 %1814
        %1816 = vrot.lane.b32.xlu0 %v947, 56
        %v1817 = vpop.permute.xlu0 %1816
        %1818 = vrot.lane.b32.xlu0 %v948, 56
        %v1819 = vpop.permute.xlu0 %1818
        %1820 = vrot.lane.b32.xlu0 %v949, 56
        %v1821 = vpop.permute.xlu0 %1820
        %1822 = vrot.lane.b32.xlu0 %v950, 56
        %v1823 = vpop.permute.xlu0 %1822
        %1824 = vrot.lane.b32.xlu0 %v951, 56
        %v1825 = vpop.permute.xlu0 %1824
        %1826 = vrot.lane.b32.xlu0 %v952, 56
        %v1827 = vpop.permute.xlu0 %1826
        %1828 = vrot.lane.b32.xlu0 %v953, 56
        %v1829 = vpop.permute.xlu0 %1828
        %1830 = vrot.lane.b32.xlu0 %v954, 56
        %v1831 = vpop.permute.xlu0 %1830
        %1832 = vrot.lane.b32.xlu0 %v955, 56
        %v1833 = vpop.permute.xlu0 %1832
        %1834 = vrot.lane.b32.xlu0 %v956, 56
        %v1835 = vpop.permute.xlu0 %1834
        %1836 = vrot.lane.b32.xlu0 %v957, 56
        %v1837 = vpop.permute.xlu0 %1836
        %1838 = vrot.lane.b32.xlu0 %v958, 56
        %v1839 = vpop.permute.xlu0 %1838
        %1840 = vrot.lane.b32.xlu0 %v959, 56
        %v1841 = vpop.permute.xlu0 %1840
        %1842 = vrot.lane.b32.xlu0 %v960, 56
        %v1843 = vpop.permute.xlu0 %1842
        %1844 = vrot.lane.b32.xlu0 %v961, 56
        %v1845 = vpop.permute.xlu0 %1844
        %1846 = vrot.lane.b32.xlu0 %v962, 56
        %v1847 = vpop.permute.xlu0 %1846
        %1848 = vrot.lane.b32.xlu0 %v963, 56
        %v1849 = vpop.permute.xlu0 %1848
        %1850 = vrot.lane.b32.xlu0 %v964, 56
        %v1851 = vpop.permute.xlu0 %1850
        %1852 = vrot.lane.b32.xlu0 %v965, 56
        %v1853 = vpop.permute.xlu0 %1852
        %1854 = vrot.lane.b32.xlu0 %v966, 56
        %v1855 = vpop.permute.xlu0 %1854
        %1856 = vrot.lane.b32.xlu0 %v967, 56
        %v1857 = vpop.permute.xlu0 %1856
        %1858 = vrot.lane.b32.xlu0 %v968, 56
        %v1859 = vpop.permute.xlu0 %1858
        %1860 = vrot.lane.b32.xlu0 %v969, 56
        %v1861 = vpop.permute.xlu0 %1860
        %1862 = vrot.lane.b32.xlu0 %v970, 56
        %v1863 = vpop.permute.xlu0 %1862
        %1864 = vrot.lane.b32.xlu0 %v971, 56
        %v1865 = vpop.permute.xlu0 %1864
        %1866 = vrot.lane.b32.xlu0 %v972, 56
        %v1867 = vpop.permute.xlu0 %1866
        %1868 = vrot.lane.b32.xlu0 %v973, 56
        %v1869 = vpop.permute.xlu0 %1868
        %1934 = vrot.lane.b32.xlu0 %v974, 64
        %v1935 = vpop.permute.xlu0 %1934
        %1936 = vrot.lane.b32.xlu0 %v975, 64
        %v1937 = vpop.permute.xlu0 %1936
        %1938 = vrot.lane.b32.xlu0 %v976, 64
        %v1939 = vpop.permute.xlu0 %1938
        %1940 = vrot.lane.b32.xlu0 %v977, 64
        %v1941 = vpop.permute.xlu0 %1940
        %1942 = vrot.lane.b32.xlu0 %v978, 64
        %v1943 = vpop.permute.xlu0 %1942
        %1944 = vrot.lane.b32.xlu0 %v979, 64
        %v1945 = vpop.permute.xlu0 %1944
        %1946 = vrot.lane.b32.xlu0 %v980, 64
        %v1947 = vpop.permute.xlu0 %1946
        %1948 = vrot.lane.b32.xlu0 %v981, 64
        %v1949 = vpop.permute.xlu0 %1948
        %1950 = vrot.lane.b32.xlu0 %v982, 64
        %v1951 = vpop.permute.xlu0 %1950
        %1952 = vrot.lane.b32.xlu0 %v983, 64
        %v1953 = vpop.permute.xlu0 %1952
        %1954 = vrot.lane.b32.xlu0 %v984, 64
        %v1955 = vpop.permute.xlu0 %1954
        %1956 = vrot.lane.b32.xlu0 %v985, 64
        %v1957 = vpop.permute.xlu0 %1956
        %1958 = vrot.lane.b32.xlu0 %v986, 64
        %v1959 = vpop.permute.xlu0 %1958
        %1960 = vrot.lane.b32.xlu0 %v987, 64
        %v1961 = vpop.permute.xlu0 %1960
        %1962 = vrot.lane.b32.xlu0 %v988, 64
        %v1963 = vpop.permute.xlu0 %1962
        %1964 = vrot.lane.b32.xlu0 %v989, 64
        %v1965 = vpop.permute.xlu0 %1964
        %1966 = vrot.lane.b32.xlu0 %v990, 64
        %v1967 = vpop.permute.xlu0 %1966
        %1968 = vrot.lane.b32.xlu0 %v991, 64
        %v1969 = vpop.permute.xlu0 %1968
        %1970 = vrot.lane.b32.xlu0 %v992, 64
        %v1971 = vpop.permute.xlu0 %1970
        %1972 = vrot.lane.b32.xlu0 %v993, 64
        %v1973 = vpop.permute.xlu0 %1972
        %1974 = vrot.lane.b32.xlu0 %v994, 64
        %v1975 = vpop.permute.xlu0 %1974
        %1976 = vrot.lane.b32.xlu0 %v995, 64
        %v1977 = vpop.permute.xlu0 %1976
        %1978 = vrot.lane.b32.xlu0 %v996, 64
        %v1979 = vpop.permute.xlu0 %1978
        %1980 = vrot.lane.b32.xlu0 %v997, 64
        %v1981 = vpop.permute.xlu0 %1980
        %1982 = vrot.lane.b32.xlu0 %v998, 64
        %v1983 = vpop.permute.xlu0 %1982
        %1984 = vrot.lane.b32.xlu0 %v999, 64
        %v1985 = vpop.permute.xlu0 %1984
        %1986 = vrot.lane.b32.xlu0 %v1000, 64
        %v1987 = vpop.permute.xlu0 %1986
        %1988 = vrot.lane.b32.xlu0 %v1001, 64
        %v1989 = vpop.permute.xlu0 %1988
        %1990 = vrot.lane.b32.xlu0 %v1002, 64
        %v1991 = vpop.permute.xlu0 %1990
        %1992 = vrot.lane.b32.xlu0 %v1003, 64
        %v1993 = vpop.permute.xlu0 %1992
        %1994 = vrot.lane.b32.xlu0 %v1004, 64
        %v1995 = vpop.permute.xlu0 %1994
        %1996 = vrot.lane.b32.xlu0 %v1005, 64
        %v1997 = vpop.permute.xlu0 %1996
        %v2030 = vsel %vm271, %v717, %v1039
        %v2031 = vsel %vm271, %v718, %v1041
        %v2032 = vsel %vm271, %v719, %v1043
        %v2033 = vsel %vm271, %v720, %v1045
        %v2034 = vsel %vm271, %v721, %v1047
        %v2035 = vsel %vm271, %v722, %v1049
        %v2036 = vsel %vm271, %v723, %v1051
        %v2037 = vsel %vm271, %v724, %v1053
        %v2038 = vsel %vm271, %v725, %v1055
        %v2039 = vsel %vm271, %v726, %v1057
        %v2040 = vsel %vm271, %v727, %v1059
        %v2041 = vsel %vm271, %v728, %v1061
        %v2042 = vsel %vm271, %v729, %v1063
        %v2043 = vsel %vm271, %v730, %v1065
        %v2044 = vsel %vm271, %v731, %v1067
        %v2045 = vsel %vm271, %v732, %v1069
        %v2046 = vsel %vm271, %v733, %v1071
        %v2047 = vsel %vm271, %v734, %v1073
        %v2048 = vsel %vm271, %v735, %v1075
        %v2049 = vsel %vm271, %v736, %v1077
        %v2050 = vsel %vm271, %v737, %v1079
        %v2051 = vsel %vm271, %v738, %v1081
        %v2052 = vsel %vm271, %v739, %v1083
        %v2053 = vsel %vm271, %v740, %v1085
        %v2054 = vsel %vm271, %v741, %v1087
        %v2055 = vsel %vm271, %v742, %v1089
        %v2056 = vsel %vm271, %v743, %v1091
        %v2057 = vsel %vm271, %v744, %v1093
        %v2058 = vsel %vm271, %v745, %v1095
        %v2059 = vsel %vm271, %v746, %v1097
        %v2060 = vsel %vm271, %v747, %v1099
        %v2061 = vsel %vm271, %v748, %v1101
        %vm2062 = vcmask 130048
        %v2063 = vsel %vm2062, %v2030, %v1167
        %v2064 = vsel %vm2062, %v2031, %v1169
        %v2065 = vsel %vm2062, %v2032, %v1171
        %v2066 = vsel %vm2062, %v2033, %v1173
        %v2067 = vsel %vm2062, %v2034, %v1175
        %v2068 = vsel %vm2062, %v2035, %v1177
        %v2069 = vsel %vm2062, %v2036, %v1179
        %v2070 = vsel %vm2062, %v2037, %v1181
        %v2071 = vsel %vm2062, %v2038, %v1183
        %v2072 = vsel %vm2062, %v2039, %v1185
        %v2073 = vsel %vm2062, %v2040, %v1187
        %v2074 = vsel %vm2062, %v2041, %v1189
        %v2075 = vsel %vm2062, %v2042, %v1191
        %v2076 = vsel %vm2062, %v2043, %v1193
        %v2077 = vsel %vm2062, %v2044, %v1195
        %v2078 = vsel %vm2062, %v2045, %v1197
        %v2079 = vsel %vm2062, %v2046, %v1199
        %v2080 = vsel %vm2062, %v2047, %v1201
        %v2081 = vsel %vm2062, %v2048, %v1203
        %v2082 = vsel %vm2062, %v2049, %v1205
        %v2083 = vsel %vm2062, %v2050, %v1207
        %v2084 = vsel %vm2062, %v2051, %v1209
        %v2085 = vsel %vm2062, %v2052, %v1211
        %v2086 = vsel %vm2062, %v2053, %v1213
        %v2087 = vsel %vm2062, %v2054, %v1215
        %v2088 = vsel %vm2062, %v2055, %v1217
        %v2089 = vsel %vm2062, %v2056, %v1219
        %v2090 = vsel %vm2062, %v2057, %v1221
        %v2091 = vsel %vm2062, %v2058, %v1223
        %v2092 = vsel %vm2062, %v2059, %v1225
        %v2093 = vsel %vm2062, %v2060, %v1227
        %v2094 = vsel %vm2062, %v2061, %v1229
        %vm2095 = vcmask 195584
        %v2096 = vsel %vm2095, %v2063, %v1295
        %v2097 = vsel %vm2095, %v2064, %v1297
        %v2098 = vsel %vm2095, %v2065, %v1299
        %v2099 = vsel %vm2095, %v2066, %v1301
        %v2100 = vsel %vm2095, %v2067, %v1303
        %v2101 = vsel %vm2095, %v2068, %v1305
        %v2102 = vsel %vm2095, %v2069, %v1307
        %v2103 = vsel %vm2095, %v2070, %v1309
        %v2104 = vsel %vm2095, %v2071, %v1311
        %v2105 = vsel %vm2095, %v2072, %v1313
        %v2106 = vsel %vm2095, %v2073, %v1315
        %v2107 = vsel %vm2095, %v2074, %v1317
        %v2108 = vsel %vm2095, %v2075, %v1319
        %v2109 = vsel %vm2095, %v2076, %v1321
        %v2110 = vsel %vm2095, %v2077, %v1323
        %v2111 = vsel %vm2095, %v2078, %v1325
        %v2112 = vsel %vm2095, %v2079, %v1327
        %v2113 = vsel %vm2095, %v2080, %v1329
        %v2114 = vsel %vm2095, %v2081, %v1331
        %v2115 = vsel %vm2095, %v2082, %v1333
        %v2116 = vsel %vm2095, %v2083, %v1335
        %v2117 = vsel %vm2095, %v2084, %v1337
        %v2118 = vsel %vm2095, %v2085, %v1339
        %v2119 = vsel %vm2095, %v2086, %v1341
        %v2120 = vsel %vm2095, %v2087, %v1343
        %v2121 = vsel %vm2095, %v2088, %v1345
        %v2122 = vsel %vm2095, %v2089, %v1347
        %v2123 = vsel %vm2095, %v2090, %v1349
        %v2124 = vsel %vm2095, %v2091, %v1351
        %v2125 = vsel %vm2095, %v2092, %v1353
        %v2126 = vsel %vm2095, %v2093, %v1355
        %v2127 = vsel %vm2095, %v2094, %v1357
        %vm2128 = vcmask 261120
        %v2129 = vsel %vm2128, %v2096, %v1423
        %v2130 = vsel %vm2128, %v2097, %v1425
        %v2131 = vsel %vm2128, %v2098, %v1427
        %v2132 = vsel %vm2128, %v2099, %v1429
        %v2133 = vsel %vm2128, %v2100, %v1431
        %v2134 = vsel %vm2128, %v2101, %v1433
        %v2135 = vsel %vm2128, %v2102, %v1435
        %v2136 = vsel %vm2128, %v2103, %v1437
        %v2137 = vsel %vm2128, %v2104, %v1439
        %v2138 = vsel %vm2128, %v2105, %v1441
        %v2139 = vsel %vm2128, %v2106, %v1443
        %v2140 = vsel %vm2128, %v2107, %v1445
        %v2141 = vsel %vm2128, %v2108, %v1447
        %v2142 = vsel %vm2128, %v2109, %v1449
        %v2143 = vsel %vm2128, %v2110, %v1451
        %v2144 = vsel %vm2128, %v2111, %v1453
        %v2145 = vsel %vm2128, %v2112, %v1455
        %v2146 = vsel %vm2128, %v2113, %v1457
        %v2147 = vsel %vm2128, %v2114, %v1459
        %v2148 = vsel %vm2128, %v2115, %v1461
        %v2149 = vsel %vm2128, %v2116, %v1463
        %v2150 = vsel %vm2128, %v2117, %v1465
        %v2151 = vsel %vm2128, %v2118, %v1467
        %v2152 = vsel %vm2128, %v2119, %v1469
        %v2153 = vsel %vm2128, %v2120, %v1471
        %v2154 = vsel %vm2128, %v2121, %v1473
        %v2155 = vsel %vm2128, %v2122, %v1475
        %v2156 = vsel %vm2128, %v2123, %v1477
        %v2157 = vsel %vm2128, %v2124, %v1479
        %v2158 = vsel %vm2128, %v2125, %v1481
        %v2159 = vsel %vm2128, %v2126, %v1483
        %v2160 = vsel %vm2128, %v2127, %v1485
        %vm2161 = vcmask 326656
        %v2162 = vsel %vm2161, %v2129, %v1551
        %v2163 = vsel %vm2161, %v2130, %v1553
        %v2164 = vsel %vm2161, %v2131, %v1555
        %v2165 = vsel %vm2161, %v2132, %v1557
        %v2166 = vsel %vm2161, %v2133, %v1559
        %v2167 = vsel %vm2161, %v2134, %v1561
        %v2168 = vsel %vm2161, %v2135, %v1563
        %v2169 = vsel %vm2161, %v2136, %v1565
        %v2170 = vsel %vm2161, %v2137, %v1567
        %v2171 = vsel %vm2161, %v2138, %v1569
        %v2172 = vsel %vm2161, %v2139, %v1571
        %v2173 = vsel %vm2161, %v2140, %v1573
        %v2174 = vsel %vm2161, %v2141, %v1575
        %v2175 = vsel %vm2161, %v2142, %v1577
        %v2176 = vsel %vm2161, %v2143, %v1579
        %v2177 = vsel %vm2161, %v2144, %v1581
        %v2178 = vsel %vm2161, %v2145, %v1583
        %v2179 = vsel %vm2161, %v2146, %v1585
        %v2180 = vsel %vm2161, %v2147, %v1587
        %v2181 = vsel %vm2161, %v2148, %v1589
        %v2182 = vsel %vm2161, %v2149, %v1591
        %v2183 = vsel %vm2161, %v2150, %v1593
        %v2184 = vsel %vm2161, %v2151, %v1595
        %v2185 = vsel %vm2161, %v2152, %v1597
        %v2186 = vsel %vm2161, %v2153, %v1599
        %v2187 = vsel %vm2161, %v2154, %v1601
        %v2188 = vsel %vm2161, %v2155, %v1603
        %v2189 = vsel %vm2161, %v2156, %v1605
        %v2190 = vsel %vm2161, %v2157, %v1607
        %v2191 = vsel %vm2161, %v2158, %v1609
        %v2192 = vsel %vm2161, %v2159, %v1611
        %v2193 = vsel %vm2161, %v2160, %v1613
        %vm2194 = vcmask 392192
        %v2195 = vsel %vm2194, %v2162, %v1679
        %v2196 = vsel %vm2194, %v2163, %v1681
        %v2197 = vsel %vm2194, %v2164, %v1683
        %v2198 = vsel %vm2194, %v2165, %v1685
        %v2199 = vsel %vm2194, %v2166, %v1687
        %v2200 = vsel %vm2194, %v2167, %v1689
        %v2201 = vsel %vm2194, %v2168, %v1691
        %v2202 = vsel %vm2194, %v2169, %v1693
        %v2203 = vsel %vm2194, %v2170, %v1695
        %v2204 = vsel %vm2194, %v2171, %v1697
        %v2205 = vsel %vm2194, %v2172, %v1699
        %v2206 = vsel %vm2194, %v2173, %v1701
        %v2207 = vsel %vm2194, %v2174, %v1703
        %v2208 = vsel %vm2194, %v2175, %v1705
        %v2209 = vsel %vm2194, %v2176, %v1707
        %v2210 = vsel %vm2194, %v2177, %v1709
        %v2211 = vsel %vm2194, %v2178, %v1711
        %v2212 = vsel %vm2194, %v2179, %v1713
        %v2213 = vsel %vm2194, %v2180, %v1715
        %v2214 = vsel %vm2194, %v2181, %v1717
        %v2215 = vsel %vm2194, %v2182, %v1719
        %v2216 = vsel %vm2194, %v2183, %v1721
        %v2217 = vsel %vm2194, %v2184, %v1723
        %v2218 = vsel %vm2194, %v2185, %v1725
        %v2219 = vsel %vm2194, %v2186, %v1727
        %v2220 = vsel %vm2194, %v2187, %v1729
        %v2221 = vsel %vm2194, %v2188, %v1731
        %v2222 = vsel %vm2194, %v2189, %v1733
        %v2223 = vsel %vm2194, %v2190, %v1735
        %v2224 = vsel %vm2194, %v2191, %v1737
        %v2225 = vsel %vm2194, %v2192, %v1739
        %v2226 = vsel %vm2194, %v2193, %v1741
        %vm2227 = vcmask 457728
        %v2228 = vsel %vm2227, %v2195, %v1807
        %v2229 = vsel %vm2227, %v2196, %v1809
        %v2230 = vsel %vm2227, %v2197, %v1811
        %v2231 = vsel %vm2227, %v2198, %v1813
        %v2232 = vsel %vm2227, %v2199, %v1815
        %v2233 = vsel %vm2227, %v2200, %v1817
        %v2234 = vsel %vm2227, %v2201, %v1819
        %v2235 = vsel %vm2227, %v2202, %v1821
        %v2236 = vsel %vm2227, %v2203, %v1823
        %v2237 = vsel %vm2227, %v2204, %v1825
        %v2238 = vsel %vm2227, %v2205, %v1827
        %v2239 = vsel %vm2227, %v2206, %v1829
        %v2240 = vsel %vm2227, %v2207, %v1831
        %v2241 = vsel %vm2227, %v2208, %v1833
        %v2242 = vsel %vm2227, %v2209, %v1835
        %v2243 = vsel %vm2227, %v2210, %v1837
        %v2244 = vsel %vm2227, %v2211, %v1839
        %v2245 = vsel %vm2227, %v2212, %v1841
        %v2246 = vsel %vm2227, %v2213, %v1843
        %v2247 = vsel %vm2227, %v2214, %v1845
        %v2248 = vsel %vm2227, %v2215, %v1847
        %v2249 = vsel %vm2227, %v2216, %v1849
        %v2250 = vsel %vm2227, %v2217, %v1851
        %v2251 = vsel %vm2227, %v2218, %v1853
        %v2252 = vsel %vm2227, %v2219, %v1855
        %v2253 = vsel %vm2227, %v2220, %v1857
        %v2254 = vsel %vm2227, %v2221, %v1859
        %v2255 = vsel %vm2227, %v2222, %v1861
        %v2256 = vsel %vm2227, %v2223, %v1863
        %v2257 = vsel %vm2227, %v2224, %v1865
        %v2258 = vsel %vm2227, %v2225, %v1867
        %v2259 = vsel %vm2227, %v2226, %v1869
        %vm2260 = vcmask 523264
        %v2261 = vsel %vm2260, %v2228, %v1935
        %v2262 = vsel %vm2260, %v2229, %v1937
        %v2263 = vsel %vm2260, %v2230, %v1939
        %v2264 = vsel %vm2260, %v2231, %v1941
        %v2265 = vsel %vm2260, %v2232, %v1943
        %v2266 = vsel %vm2260, %v2233, %v1945
        %v2267 = vsel %vm2260, %v2234, %v1947
        %v2268 = vsel %vm2260, %v2235, %v1949
        %v2269 = vsel %vm2260, %v2236, %v1951
        %v2270 = vsel %vm2260, %v2237, %v1953
        %v2271 = vsel %vm2260, %v2238, %v1955
        %v2272 = vsel %vm2260, %v2239, %v1957
        %v2273 = vsel %vm2260, %v2240, %v1959
        %v2274 = vsel %vm2260, %v2241, %v1961
        %v2275 = vsel %vm2260, %v2242, %v1963
        %v2276 = vsel %vm2260, %v2243, %v1965
        %v2277 = vsel %vm2260, %v2244, %v1967
        %v2278 = vsel %vm2260, %v2245, %v1969
        %v2279 = vsel %vm2260, %v2246, %v1971
        %v2280 = vsel %vm2260, %v2247, %v1973
        %v2281 = vsel %vm2260, %v2248, %v1975
        %v2282 = vsel %vm2260, %v2249, %v1977
        %v2283 = vsel %vm2260, %v2250, %v1979
        %v2284 = vsel %vm2260, %v2251, %v1981
        %v2285 = vsel %vm2260, %v2252, %v1983
        %v2286 = vsel %vm2260, %v2253, %v1985
        %v2287 = vsel %vm2260, %v2254, %v1987
        %v2288 = vsel %vm2260, %v2255, %v1989
        %v2289 = vsel %vm2260, %v2256, %v1991
        %v2290 = vsel %vm2260, %v2257, %v1993
        %v2291 = vsel %vm2260, %v2258, %v1995
        %v2292 = vsel %vm2260, %v2259, %v1997
        %v2293 = vpack.c.bf16 %v2262, %v2261
        %v2294 = vpack.c.bf16 %v2264, %v2263
        %v2295 = vpack.c.bf16 %v2266, %v2265
        %v2296 = vpack.c.bf16 %v2268, %v2267
        %v2297 = vpack.c.bf16 %v2270, %v2269
        %v2298 = vpack.c.bf16 %v2272, %v2271
        %v2299 = vpack.c.bf16 %v2274, %v2273
        %v2300 = vpack.c.bf16 %v2276, %v2275
        %v2301 = vpack.c.bf16 %v2278, %v2277
        %v2302 = vpack.c.bf16 %v2280, %v2279
        %v2303 = vpack.c.bf16 %v2282, %v2281
        %v2304 = vpack.c.bf16 %v2284, %v2283
        %v2305 = vpack.c.bf16 %v2286, %v2285
        %v2306 = vpack.c.bf16 %v2288, %v2287
        %v2307 = vpack.c.bf16 %v2290, %v2289
        %v2308 = vpack.c.bf16 %v2292, %v2291
        %v2309 = vld [vmem:[%s4] sm:$0xf]
        %v2310 = vld [vmem:[%s4 + $0x4] sm:$0xf]
        %v2311 = vld [vmem:[%s4 + $0x8] sm:$0xf]
        %v2312 = vld [vmem:[%s4 + $0xc] sm:$0xf]
        %v2313 = vld [vmem:[%s4 + $0x10] sm:$0xf]
        %v2314 = vld [vmem:[%s4 + $0x14] sm:$0xf]
        %v2315 = vld [vmem:[%s4 + $0x18] sm:$0xf]
        %v2316 = vld [vmem:[%s4 + $0x1c] sm:$0xf]
        %v2317 = vld [vmem:[%s4 + $0x20] sm:$0xf]
        %v2318 = vld [vmem:[%s5] sm:$0x1]
        %v2320 = vlaneseq
        %v2321 = vshrl.u32 %v2320, 7
        %v2322 = vsub.s32 0, %v2321
        %v2323 = vrot.slane %v2318, %v2322
        %v2334 = vunpack.c.l.b16 %v2309
        %v2335 = vunpack.c.l.b16 %v2310
        %v2336 = vunpack.c.l.b16 %v2311
        %v2337 = vunpack.c.l.b16 %v2312
        %v2338 = vunpack.c.l.b16 %v2313
        %v2339 = vunpack.c.l.b16 %v2314
        %v2340 = vunpack.c.l.b16 %v2315
        %v2341 = vunpack.c.l.b16 %v2316
        %v2342 = vunpack.c.l.b16 %v2317
        %v2343 = vpack.c.b16 %v2335, %v2334
        %v2344 = vpack.c.b16 %v2337, %v2336
        %v2345 = vpack.c.b16 %v2339, %v2338
        %v2346 = vpack.c.b16 %v2341, %v2340
        %v2347 = vpack.c.b16 %v2342, %v2342
        %vm2352 = vcmask 588800
        %v2354 = vsel %vm2352, %v2293, 0
        %v2357 = vsel %vm2352, %v2294, 0
        %v2360 = vsel %vm2352, %v2295, 0
        %v2363 = vsel %vm2352, %v2296, 0
        %v2366 = vsel %vm2352, %v2297, 0
        %v2369 = vsel %vm2352, %v2298, 0
        %v2372 = vsel %vm2352, %v2299, 0
        %v2375 = vsel %vm2352, %v2300, 0
        %v2378 = vsel %vm2352, %v2301, 0
        %v2381 = vsel %vm2352, %v2302, 0
        %v2384 = vsel %vm2352, %v2303, 0
        %v2387 = vsel %vm2352, %v2304, 0
        %v2390 = vsel %vm2352, %v2305, 0
        %v2393 = vsel %vm2352, %v2306, 0
        %v2396 = vsel %vm2352, %v2307, 0
        %v2399 = vsel %vm2352, %v2308, 0
        %vm2401 = vcmask 1043456
        %v2403 = vsel %vm2401, %v2347, 0
        %2405 = vmatprep.subr.bf16.mxu0 0
        %2406 = vmatpush1.bf16.msra.mxu0 %v2343
        %2407 = vmatprep.subr.bf16.mxu0 0
        %2408 = vmatpush1.bf16.msra.mxu0 %v2344
        %2409 = vmatprep.subr.bf16.mxu0 0
        %2410 = vmatpush1.bf16.msra.mxu0 %v2345
        %2411 = vmatprep.subr.bf16.mxu0 0
        %2412 = vmatpush1.bf16.msra.mxu0 %v2346
        %2413 = vmatprep.subr.bf16.mxu0 0
        %2414 = vmatpush1.bf16.msra.mxu0 %v2403
        %2415 = vmatprep.subr.bf16.mxu0 0
        %2416 = vmatpush1.bf16.msra.mxu0 0
        %2417 = vmatprep.subr.bf16.mxu0 0
        %2418 = vmatpush1.bf16.msra.mxu0 0
        %2419 = vmatprep.subr.bf16.mxu0 0
        %2420 = vmatpush1.bf16.msra.mxu0 0
        %2421 = vmatprep.subr.bf16.mxu0 0
        %2422 = vmatpush1.bf16.msra.mxu0 0
        %2423 = vmatprep.subr.bf16.mxu0 0
        %2424 = vmatpush1.bf16.msra.mxu0 0
        %2425 = vmatprep.subr.bf16.mxu0 0
        %2426 = vmatpush1.bf16.msra.mxu0 0
        %2427 = vmatprep.subr.bf16.mxu0 0
        %2428 = vmatpush1.bf16.msra.mxu0 0
        %2429 = vmatprep.subr.bf16.mxu0 0
        %2430 = vmatpush1.bf16.msra.mxu0 0
        %2431 = vmatprep.subr.bf16.mxu0 0
        %2432 = vmatpush1.bf16.msra.mxu0 0
        %2433 = vmatprep.subr.bf16.mxu0 0
        %2434 = vmatpush1.bf16.msra.mxu0 0
        %2435 = vmatprep.subr.bf16.mxu0 0
        %2436 = vmatpush1.bf16.msra.mxu0 0
        %2437 = vmatprep.mubr.bf16.mxu0 0
        %2438 = vmatmul.mubr.bf16.gmra.mrb[0].mxu0 %v2354
        %v2439 = vpop.f32.mrb[0].mxu0
        %v2440 = vadd.f32 %v2323, %v2439
        %v2441 = vpop.f32.mrb[0].mxu0
        %v2442 = vpop.f32.mrb[0].mxu0
        %v2443 = vadd.f32 %v2323, %v2442
        %v2444 = vpop.f32.mrb[0].mxu0
        %2445 = vmatprep.mubr.bf16.mxu0 0
        %2446 = vmatmul.mubr.bf16.gmra.mrb[0].mxu0 %v2357
        %v2447 = vpop.f32.mrb[0].mxu0
        %v2448 = vadd.f32 %v2323, %v2447
        %v2449 = vpop.f32.mrb[0].mxu0
        %v2450 = vpop.f32.mrb[0].mxu0
        %v2451 = vadd.f32 %v2323, %v2450
        %v2452 = vpop.f32.mrb[0].mxu0
        %2453 = vmatprep.mubr.bf16.mxu0 0
        %2454 = vmatmul.mubr.bf16.gmra.mrb[0].mxu0 %v2360
        %v2455 = vpop.f32.mrb[0].mxu0
        %v2456 = vadd.f32 %v2323, %v2455
        %v2457 = vpop.f32.mrb[0].mxu0
        %v2458 = vpop.f32.mrb[0].mxu0
        %v2459 = vadd.f32 %v2323, %v2458
        %v2460 = vpop.f32.mrb[0].mxu0
        %2461 = vmatprep.mubr.bf16.mxu0 0
        %2462 = vmatmul.mubr.bf16.gmra.mrb[0].mxu0 %v2363
        %v2463 = vpop.f32.mrb[0].mxu0
        %v2464 = vadd.f32 %v2323, %v2463
        %v2465 = vpop.f32.mrb[0].mxu0
        %v2466 = vpop.f32.mrb[0].mxu0
        %v2467 = vadd.f32 %v2323, %v2466
        %v2468 = vpop.f32.mrb[0].mxu0
        %2469 = vmatprep.mubr.bf16.mxu0 0
        %2470 = vmatmul.mubr.bf16.gmra.mrb[0].mxu0 %v2366
        %v2471 = vpop.f32.mrb[0].mxu0
        %v2472 = vadd.f32 %v2323, %v2471
        %v2473 = vpop.f32.mrb[0].mxu0
        %v2474 = vpop.f32.mrb[0].mxu0
        %v2475 = vadd.f32 %v2323, %v2474
        %v2476 = vpop.f32.mrb[0].mxu0
        %2477 = vmatprep.mubr.bf16.mxu0 0
        %2478 = vmatmul.mubr.bf16.gmra.mrb[0].mxu0 %v2369
        %v2479 = vpop.f32.mrb[0].mxu0
        %v2480 = vadd.f32 %v2323, %v2479
        %v2481 = vpop.f32.mrb[0].mxu0
        %v2482 = vpop.f32.mrb[0].mxu0
        %v2483 = vadd.f32 %v2323, %v2482
        %v2484 = vpop.f32.mrb[0].mxu0
        %2485 = vmatprep.mubr.bf16.mxu0 0
        %2486 = vmatmul.mubr.bf16.gmra.mrb[0].mxu0 %v2372
        %v2487 = vpop.f32.mrb[0].mxu0
        %v2488 = vadd.f32 %v2323, %v2487
        %v2489 = vpop.f32.mrb[0].mxu0
        %v2490 = vpop.f32.mrb[0].mxu0
        %v2491 = vadd.f32 %v2323, %v2490
        %v2492 = vpop.f32.mrb[0].mxu0
        %2493 = vmatprep.mubr.bf16.mxu0 0
        %2494 = vmatmul.mubr.bf16.gmra.mrb[0].mxu0 %v2375
        %v2495 = vpop.f32.mrb[0].mxu0
        %v2496 = vadd.f32 %v2323, %v2495
        %v2497 = vpop.f32.mrb[0].mxu0
        %v2498 = vpop.f32.mrb[0].mxu0
        %v2499 = vadd.f32 %v2323, %v2498
        %v2500 = vpop.f32.mrb[0].mxu0
        %2501 = vmatprep.mubr.bf16.mxu0 0
        %2502 = vmatmul.mubr.bf16.gmra.mrb[0].mxu0 %v2378
        %v2503 = vpop.f32.mrb[0].mxu0
        %v2504 = vadd.f32 %v2323, %v2503
        %v2505 = vpop.f32.mrb[0].mxu0
        %v2506 = vpop.f32.mrb[0].mxu0
        %v2507 = vadd.f32 %v2323, %v2506
        %v2508 = vpop.f32.mrb[0].mxu0
        %2509 = vmatprep.mubr.bf16.mxu0 0
        %2510 = vmatmul.mubr.bf16.gmra.mrb[0].mxu0 %v2381
        %v2511 = vpop.f32.mrb[0].mxu0
        %v2512 = vadd.f32 %v2323, %v2511
        %v2513 = vpop.f32.mrb[0].mxu0
        %v2514 = vpop.f32.mrb[0].mxu0
        %v2515 = vadd.f32 %v2323, %v2514
        %v2516 = vpop.f32.mrb[0].mxu0
        %2517 = vmatprep.mubr.bf16.mxu0 0
        %2518 = vmatmul.mubr.bf16.gmra.mrb[0].mxu0 %v2384
        %v2519 = vpop.f32.mrb[0].mxu0
        %v2520 = vadd.f32 %v2323, %v2519
        %v2521 = vpop.f32.mrb[0].mxu0
        %v2522 = vpop.f32.mrb[0].mxu0
        %v2523 = vadd.f32 %v2323, %v2522
        %v2524 = vpop.f32.mrb[0].mxu0
        %2525 = vmatprep.mubr.bf16.mxu0 0
        %2526 = vmatmul.mubr.bf16.gmra.mrb[0].mxu0 %v2387
        %v2527 = vpop.f32.mrb[0].mxu0
        %v2528 = vadd.f32 %v2323, %v2527
        %v2529 = vpop.f32.mrb[0].mxu0
        %v2530 = vpop.f32.mrb[0].mxu0
        %v2531 = vadd.f32 %v2323, %v2530
        %v2532 = vpop.f32.mrb[0].mxu0
        %2533 = vmatprep.mubr.bf16.mxu0 0
        %2534 = vmatmul.mubr.bf16.gmra.mrb[0].mxu0 %v2390
        %v2535 = vpop.f32.mrb[0].mxu0
        %v2536 = vadd.f32 %v2323, %v2535
        %v2537 = vpop.f32.mrb[0].mxu0
        %v2538 = vpop.f32.mrb[0].mxu0
        %v2539 = vadd.f32 %v2323, %v2538
        %v2540 = vpop.f32.mrb[0].mxu0
        %2541 = vmatprep.mubr.bf16.mxu0 0
        %2542 = vmatmul.mubr.bf16.gmra.mrb[0].mxu0 %v2393
        %v2543 = vpop.f32.mrb[0].mxu0
        %v2544 = vadd.f32 %v2323, %v2543
        %v2545 = vpop.f32.mrb[0].mxu0
        %v2546 = vpop.f32.mrb[0].mxu0
        %v2547 = vadd.f32 %v2323, %v2546
        %v2548 = vpop.f32.mrb[0].mxu0
        %2549 = vmatprep.mubr.bf16.mxu0 0
        %2550 = vmatmul.mubr.bf16.gmra.mrb[0].mxu0 %v2396
        %v2551 = vpop.f32.mrb[0].mxu0
        %v2552 = vadd.f32 %v2323, %v2551
        %v2553 = vpop.f32.mrb[0].mxu0
        %v2554 = vpop.f32.mrb[0].mxu0
        %v2555 = vadd.f32 %v2323, %v2554
        %v2556 = vpop.f32.mrb[0].mxu0
        %2557 = vmatprep.mubr.bf16.mxu0 0
        %2558 = vmatmul.mubr.bf16.gmra.mrb[0].mxu0 %v2399
        %v2559 = vpop.f32.mrb[0].mxu0
        %v2560 = vadd.f32 %v2323, %v2559
        %v2561 = vpop.f32.mrb[0].mxu0
        %v2562 = vpop.f32.mrb[0].mxu0
        %v2563 = vadd.f32 %v2323, %v2562
        %v2564 = vpop.f32.mrb[0].mxu0
        %2565 = vdwg.mxu0
        %2566 = vst [vmem:[%s259] sm:$0xff] %v2440
        %2567 = vst [vmem:[%s259 + $0x8] sm:$0xff] %v2443
        %2568 = vst [vmem:[%s259 + $0x10] sm:$0xff] %v2448
        %2569 = vst [vmem:[%s259 + $0x18] sm:$0xff] %v2451
        %2570 = vst [vmem:[%s259 + $0x20] sm:$0xff] %v2456
        %2571 = vst [vmem:[%s259 + $0x28] sm:$0xff] %v2459
        %2572 = vst [vmem:[%s259 + $0x30] sm:$0xff] %v2464
        %2573 = vst [vmem:[%s259 + $0x38] sm:$0xff] %v2467
        %2574 = vst [vmem:[%s259 + $0x40] sm:$0xff] %v2472
        %2575 = vst [vmem:[%s259 + $0x48] sm:$0xff] %v2475
        %2576 = vst [vmem:[%s259 + $0x50] sm:$0xff] %v2480
        %2577 = vst [vmem:[%s259 + $0x58] sm:$0xff] %v2483
        %2578 = vst [vmem:[%s259 + $0x60] sm:$0xff] %v2488
        %2579 = vst [vmem:[%s259 + $0x68] sm:$0xff] %v2491
        %2580 = vst [vmem:[%s259 + $0x70] sm:$0xff] %v2496
        %2581 = vst [vmem:[%s259 + $0x78] sm:$0xff] %v2499
        %2582 = vst [vmem:[%s259 + $0x80] sm:$0xff] %v2504
        %2583 = vst [vmem:[%s259 + $0x88] sm:$0xff] %v2507
        %2584 = vst [vmem:[%s259 + $0x90] sm:$0xff] %v2512
        %2585 = vst [vmem:[%s259 + $0x98] sm:$0xff] %v2515
        %2586 = vst [vmem:[%s259 + $0xa0] sm:$0xff] %v2520
        %2587 = vst [vmem:[%s259 + $0xa8] sm:$0xff] %v2523
        %2588 = vst [vmem:[%s259 + $0xb0] sm:$0xff] %v2528
        %2589 = vst [vmem:[%s259 + $0xb8] sm:$0xff] %v2531
        %2590 = vst [vmem:[%s259 + $0xc0] sm:$0xff] %v2536
        %2591 = vst [vmem:[%s259 + $0xc8] sm:$0xff] %v2539
        %2592 = vst [vmem:[%s259 + $0xd0] sm:$0xff] %v2544
        %2593 = vst [vmem:[%s259 + $0xd8] sm:$0xff] %v2547
        %2594 = vst [vmem:[%s259 + $0xe0] sm:$0xff] %v2552
        %2595 = vst [vmem:[%s259 + $0xe8] sm:$0xff] %v2555
        %2596 = vst [vmem:[%s259 + $0xf0] sm:$0xff] %v2560
        %2597 = vst [vmem:[%s259 + $0xf8] sm:$0xff] %v2563
        %s2598 = sand.u32 %s164, 1
        %s2599 = scalar_lea.sflag [#allocation4], %s2598
        %s2600 = sand.u32 %s164, 1
        %s2601 = smul.addr %s2600, 256
        %s2602 = scalar_lea.vmem [#allocation3], %s2601
        // Predicated region
        $region45: #{tpu_custom_call.1} parent=43 // pred_check
          %p2603 = pneg %p174
        $region46: #{tpu_custom_call.1} parent=43 // pred_check_branch
          %2605 = sbr.rel (%p2603) target = $region48
        $region47: #{tpu_custom_call.1} parent=43 // pred_region
          %s2607 = ssub.s32 4096, 4096
          %2608 = vsyncadd %s2599, %s2607
          %s2609 = smul.addr %s20, 32
          %s2610 = smul.addr %s2609, 128
          %s2611 = scalar_lea.hbm %s6, %s2610
          %s2612 = sshll.u32 %s2602, 4
          %s2613 = int_to_ptr.vmem [resolvable:$true] %s2612
          %2618 = dma.vmem_to_hbm [thread:$0]  %s2613, 4096, %s2611, %s2599, 128, 128, 8
        $region48: #{tpu_custom_call.1} parent=43 // pred_fallthru
          _
      $region44: #{tpu_custom_call.1} parent=5 // pred_fallthru
        _
      %p2619 = scmp.le.s32.totalorder 2, %s15
      // Predicated region
      $region49: #{tpu_custom_call.1} parent=5 // pred_check
        %p2620 = pneg %p2619
      $region50: #{tpu_custom_call.1} parent=5 // pred_check_branch
        %2622 = sbr.rel (%p2620) target = $region52
      $region51: #{tpu_custom_call.1} parent=5 // pred_region
        %s2623 = ssub.s32 %s15, 2
        // Predicated region
        $region53: #{tpu_custom_call.1} parent=51 // pred_check
          %p2624 = pneg %p180
        $region54: #{tpu_custom_call.1} parent=51 // pred_check_branch
          %2626 = sbr.rel (%p2624) target = $region56
        $region55: #{tpu_custom_call.1} parent=51 // pred_region
          %s2627 = sand.u32 %s165, 1
          %s2628 = scalar_lea.sflag [#allocation4], %s2627
          %s2629 = sand.u32 %s165, 1
          %s2630 = smul.addr %s2629, 256
          %s2631 = scalar_lea.vmem [#allocation3], %s2630
          %2632 = dma.done %s2628, 4096
        $region56: #{tpu_custom_call.1} parent=51 // pred_fallthru
          _
      $region52: #{tpu_custom_call.1} parent=5 // pred_fallthru
        _
    $region6: #{tpu_custom_call.1} parent=1 // loop_footer
      %s19 = sadd.s32 1, %s15
    $region7: #{tpu_custom_call.1} parent=1 // loop_footer_branch
      %14 = sbr.rel target = $region3
    $region8: #{tpu_custom_call.1} parent=1 // loop_exit
      _
    %2633 = vsyncpa [#allocation4], 1
    %s2634 = scalar_lea.sflag [#allocation4], 1
    %2635 = vsyncpa %s2634, 1

</llo_original>
